<compile_context>
chip_gen: v5e
topology: v5e:2x2
jax: 0.10.0
libtpu: 0.0.40
codegen_flags: <defaults>
</compile_context>

<pallas_src>
import jax
import jax.numpy as jnp
from jax.experimental import pallas as pl
from jax.experimental.pallas import tpu as pltpu


def compute_groups(channels):
    """Replicates normalization() group selection from arch_utils.py."""
    groups = 32
    if channels <= 16:
        groups = 8
    elif channels <= 64:
        groups = 16
    while channels % groups != 0:
        groups = int(groups / 2)
    assert groups > 2
    return groups


# ---------------------------------------------------------------------------
# Kernel
# ---------------------------------------------------------------------------
def _make_resblock_kernel(K, pad):
    """K: conv kernel size, pad: 'same' padding."""

    def _group_norm(h, gmat, gamma, beta, eps=1e-5):
        # h:    (L, C) f32, rows = positions, lanes = channels (one batch elem).
        # gmat: (C, C) same-group indicator pre-scaled by 1/(L*cpg), so a single
        #       tiny matmul turns per-channel sums into per-group means
        #       broadcast to every channel of the group.
        # Two-pass (centered) variance: matches torch's biased GroupNorm var and
        # avoids E[x^2]-mean^2 cancellation. All stats stay f32.
        s = jnp.sum(h, axis=0, keepdims=True)                            # (1, C)
        mean = jnp.dot(s, gmat, preferred_element_type=jnp.float32)      # (1, C)
        centered = h - mean                                              # VPU broadcast
        ss = jnp.sum(centered * centered, axis=0, keepdims=True)         # (1, C)
        var = jnp.dot(ss, gmat, preferred_element_type=jnp.float32)      # (1, C)
        inv = jax.lax.rsqrt(var + eps)
        return centered * (inv * gamma) + beta

    def _conv_same(h, w_ref, b):
        # 'same' Conv1d as K accumulating MXU matmuls, one per shifted tap.
        # h: (L, Cin) f32, w_ref: (K, Cin, Cout) bf16 ref, b: (1, Cout) f32.
        L = h.shape[0]
        pos = jax.lax.broadcasted_iota(jnp.int32, (L, 1), 0)
        out = None
        for k in range(K):
            off = k - pad
            if off == 0:
                hk = h
            else:
                # hk[l] = h[l + off]; zero rows whose source is out of range
                # (mask in f32, before the bf16 cast).
                hk = pltpu.roll(h, shift=(-off) % L, axis=0)
                valid = (pos + off >= 0) & (pos + off < L)
                hk = jnp.where(valid, hk, 0.0)
            t = jnp.dot(hk.astype(jnp.bfloat16), w_ref[k],
                        preferred_element_type=jnp.float32)
            out = t if out is None else out + t
        return out + b

    def kernel(x_ref, gin_ref, g1_ref, bt1_ref, w1_ref, b1_ref,
               gout_ref, g2_ref, bt2_ref, w2_ref, b2_ref,
               ws_ref, bs_ref, o_ref):
        # x_ref: (L, Cin) — one batch element (grid axis 0 = batch, "parallel").
        x = x_ref[...].astype(jnp.float32)        # GroupNorm32 computes in f32

        # in_layers: GroupNorm32 -> SiLU -> Conv1d(k=K, pad=pad)
        h = _group_norm(x, gin_ref[...], g1_ref[...], bt1_ref[...])
        h = h * jax.nn.sigmoid(h)
        h = _conv_same(h, w1_ref, b1_ref[...])

        # out_layers: GroupNorm32 -> SiLU -> Dropout(p=0, identity) -> Conv1d
        h = _group_norm(h, gout_ref[...], g2_ref[...], bt2_ref[...])
        h = h * jax.nn.sigmoid(h)
        h = _conv_same(h, w2_ref, b2_ref[...])

        # skip_connection: Conv1d(channels, out_channels, kernel_size=1) == matmul
        skip = jnp.dot(x.astype(jnp.bfloat16), ws_ref[...],
                       preferred_element_type=jnp.float32) + bs_ref[...]

        o_ref[...] = (skip + h).astype(o_ref.dtype)

    return kernel


# ---------------------------------------------------------------------------
# Wrapper (channels-last core + PyTorch-layout entry point)
# ---------------------------------------------------------------------------
def resblock_forward_channels_last(x_nlc, params, *, kernel_size=3):
    """x_nlc: (N, L, Cin) channels-last. Returns (N, L, Cout)."""
    N, L, Cin = x_nlc.shape
    Cout = params["w1_oik"].shape[0]
    K = kernel_size
    pad = 1 if kernel_size == 3 else 2

    # Grid-invariant constants, built once in the wrapper.
    def group_matrix(C):
        groups = compute_groups(C)
        cpg = C // groups
        gid = jnp.arange(C) // cpg
        return (gid[:, None] == gid[None, :]).astype(jnp.float32) / float(L * cpg)

    g_in = group_matrix(Cin)     # (Cin, Cin)
    g_out = group_matrix(Cout)   # (Cout, Cout)

    # Conv weights: torch (Cout, Cin, K) -> (K, Cin, Cout), bf16 for the MXU
    # (accumulation stays f32 via preferred_element_type in the kernel).
    w1 = jnp.transpose(params["w1_oik"], (2, 1, 0)).astype(jnp.bfloat16)       # (K, Cin, Cout)
    w2 = jnp.transpose(params["w2_oik"], (2, 1, 0)).astype(jnp.bfloat16)       # (K, Cout, Cout)
    ws = jnp.transpose(params["ws_oik"][:, :, 0], (1, 0)).astype(jnp.bfloat16)  # (Cin, Cout)

    g1 = params["g1"].reshape(1, Cin).astype(jnp.float32)
    bt1 = params["bt1"].reshape(1, Cin).astype(jnp.float32)
    b1 = params["b1"].reshape(1, Cout).astype(jnp.float32)
    g2 = params["g2"].reshape(1, Cout).astype(jnp.float32)
    bt2 = params["bt2"].reshape(1, Cout).astype(jnp.float32)
    b2 = params["b2"].reshape(1, Cout).astype(jnp.float32)
    bs = params["bs"].reshape(1, Cout).astype(jnp.float32)

    def const_spec(arr):
        # Whole-array block with a constant index map -> stays VMEM-resident.
        n = arr.ndim
        return pl.BlockSpec(arr.shape, lambda b, _n=n: (0,) * _n)

    kernel = _make_resblock_kernel(K, pad)

    # TODO(synk): for very long L (one (L, C) activation block no longer fits
    # VMEM) add an L-tile grid axis with a pad-wide halo and a two-pass
    # GroupNorm (stats pass + normalize pass).
    out_nlc = pl.pallas_call(
        kernel,
        grid=(N,),
        in_specs=[
            pl.BlockSpec((None, L, Cin), lambda b: (b, 0, 0)),   # per-batch activation tile
            const_spec(g_in), const_spec(g1), const_spec(bt1),
            const_spec(w1), const_spec(b1),
            const_spec(g_out), const_spec(g2), const_spec(bt2),
            const_spec(w2), const_spec(b2),
            const_spec(ws), const_spec(bs),
        ],
        out_specs=pl.BlockSpec((None, L, Cout), lambda b: (b, 0, 0)),
        out_shape=jax.ShapeDtypeStruct((N, L, Cout), x_nlc.dtype),
        compiler_params=pltpu.CompilerParams(
            dimension_semantics=("parallel",),      # shard batch over v7x's 2 TCs
            vmem_limit_bytes=48 * 1024 * 1024,      # explicit, headroom under v7x 64 MiB
        ),
    )(x_nlc, g_in, g1, bt1, w1, b1, g_out, g2, bt2, w2, b2, ws, bs)
    return out_nlc


def resblock_forward(x_ncl, params, *, kernel_size=3):
    """PyTorch-layout entry point: (N, C, L) -> (N, Cout, L).

    The kernel itself is channels-last; keep activations channels-last between
    ResBlocks in a real pipeline so these boundary transposes (an extra HBM
    round trip of the activations at mem-bound sizes) disappear.
    """
    x_nlc = jnp.transpose(x_ncl, (0, 2, 1))
    out_nlc = resblock_forward_channels_last(x_nlc, params, kernel_size=kernel_size)
    return jnp.transpose(out_nlc, (0, 2, 1))


# ---------------------------------------------------------------------------
# Pure-JAX reference (for correctness check)
# ---------------------------------------------------------------------------
def resblock_reference(x, params, *, kernel_size=3):
    Cin = x.shape[1]
    pad = 1 if kernel_size == 3 else 2
    groups_in = compute_groups(Cin)
    groups_out = compute_groups(params["w1_oik"].shape[0])

    def gn(x, gamma, beta, groups, eps=1e-5):
        N, C, L = x.shape
        xg = x.reshape(N, groups, (C // groups) * L)
        m = xg.mean(-1, keepdims=True)
        v = xg.var(-1, keepdims=True)
        xn = ((xg - m) / jnp.sqrt(v + eps)).reshape(N, C, L)
        return xn * gamma[None, :, None] + beta[None, :, None]

    def conv(x, w, b, p):
        y = jax.lax.conv_general_dilated(
            x, w, window_strides=(1,), padding=[(p, p)],
            dimension_numbers=("NCH", "OIH", "NCH"))
        return y + b[None, :, None]

    h = gn(x, params["g1"], params["bt1"], groups_in)
    h = jax.nn.silu(h)
    h = conv(h, params["w1_oik"], params["b1"], pad)
    h = gn(h, params["g2"], params["bt2"], groups_out)
    h = jax.nn.silu(h)
    h = conv(h, params["w2_oik"], params["b2"], pad)
    skip = conv(x, params["ws_oik"], params["bs"], 0)
    return skip + h


# ---------------------------------------------------------------------------
# Main
# ---------------------------------------------------------------------------
if __name__ == "__main__":
    N, Cin, Cout, L, K = 2, 16, 32, 64, 3

    key = jax.random.PRNGKey(0)
    ks = jax.random.split(key, 12)

    x = jax.random.normal(ks[0], (N, Cin, L), dtype=jnp.float32)

    # Deterministic parameter init (shapes from ResBlock.__init__).
    # NOTE: zero_module() would zero the second conv; we use random values so
    # that path is numerically exercised.
    params = {
        "g1":  1.0 + 0.1 * jax.random.normal(ks[1], (Cin,), jnp.float32),
        "bt1": 0.1 * jax.random.normal(ks[2], (Cin,), jnp.float32),
        "w1_oik": 0.1 * jax.random.normal(ks[3], (Cout, Cin, K), jnp.float32),
        "b1":  0.1 * jax.random.normal(ks[4], (Cout,), jnp.float32),
        "g2":  1.0 + 0.1 * jax.random.normal(ks[5], (Cout,), jnp.float32),
        "bt2": 0.1 * jax.random.normal(ks[6], (Cout,), jnp.float32),
        "w2_oik": 0.1 * jax.random.normal(ks[7], (Cout, Cout, K), jnp.float32),
        "b2":  0.1 * jax.random.normal(ks[8], (Cout,), jnp.float32),
        "ws_oik": 0.1 * jax.random.normal(ks[9], (Cout, Cin, 1), jnp.float32),
        "bs":  0.1 * jax.random.normal(ks[10], (Cout,), jnp.float32),
    }

    out = resblock_forward(x, params)
    out = jax.block_until_ready(out)

    ref = jax.block_until_ready(resblock_reference(x, params))
    assert out.shape == (N, Cout, L), out.shape
    # Tolerance loosened vs. the pure-f32 version: conv/skip matmul operands are
    # bf16 (f32 accumulation), GroupNorm statistics remain f32.
    assert jnp.allclose(out, ref, atol=2e-2, rtol=2e-2), float(jnp.max(jnp.abs(out - ref)))

    print("KERNEL_OK")
</pallas_src>

<mosaic_0001>
module attributes {stable_mosaic.version = 11 : i64} {
  func.func @kernel(%arg0: i32, %arg1: memref<1x64x16xf32, #tpu.memory_space<vmem>>, %arg2: memref<16x16xf32, #tpu.memory_space<vmem>>, %arg3: memref<1x16xf32, #tpu.memory_space<vmem>>, %arg4: memref<1x16xf32, #tpu.memory_space<vmem>>, %arg5: memref<3x16x32xbf16, #tpu.memory_space<vmem>>, %arg6: memref<1x32xf32, #tpu.memory_space<vmem>>, %arg7: memref<32x32xf32, #tpu.memory_space<vmem>>, %arg8: memref<1x32xf32, #tpu.memory_space<vmem>>, %arg9: memref<1x32xf32, #tpu.memory_space<vmem>>, %arg10: memref<3x32x32xbf16, #tpu.memory_space<vmem>>, %arg11: memref<1x32xf32, #tpu.memory_space<vmem>>, %arg12: memref<16x32xbf16, #tpu.memory_space<vmem>>, %arg13: memref<1x32xf32, #tpu.memory_space<vmem>>, %arg14: memref<1x64x32xf32, #tpu.memory_space<vmem>>) attributes {dimension_semantics = [#tpu.dimension_semantics<parallel>], iteration_bounds = array<i64: 2>, scalar_prefetch = 0 : i64, scratch_operands = 0 : i64, tpu.core_type = #tpu.core_type<tc>, window_params = [{transform_indices = @transform_0, window_bounds = array<i64: 1, 64, 16>}, {pipeline_mode = #tpu.pipeline_mode<synchronous>, transform_indices = @transform_1, window_bounds = array<i64: 16, 16>}, {pipeline_mode = #tpu.pipeline_mode<synchronous>, transform_indices = @transform_2, window_bounds = array<i64: 1, 16>}, {pipeline_mode = #tpu.pipeline_mode<synchronous>, transform_indices = @transform_3, window_bounds = array<i64: 1, 16>}, {pipeline_mode = #tpu.pipeline_mode<synchronous>, transform_indices = @transform_4, window_bounds = array<i64: 3, 16, 32>}, {pipeline_mode = #tpu.pipeline_mode<synchronous>, transform_indices = @transform_5, window_bounds = array<i64: 1, 32>}, {pipeline_mode = #tpu.pipeline_mode<synchronous>, transform_indices = @transform_6, window_bounds = array<i64: 32, 32>}, {pipeline_mode = #tpu.pipeline_mode<synchronous>, transform_indices = @transform_7, window_bounds = array<i64: 1, 32>}, {pipeline_mode = #tpu.pipeline_mode<synchronous>, transform_indices = @transform_8, window_bounds = array<i64: 1, 32>}, {pipeline_mode = #tpu.pipeline_mode<synchronous>, transform_indices = @transform_9, window_bounds = array<i64: 3, 32, 32>}, {pipeline_mode = #tpu.pipeline_mode<synchronous>, transform_indices = @transform_10, window_bounds = array<i64: 1, 32>}, {pipeline_mode = #tpu.pipeline_mode<synchronous>, transform_indices = @transform_11, window_bounds = array<i64: 16, 32>}, {pipeline_mode = #tpu.pipeline_mode<synchronous>, transform_indices = @transform_12, window_bounds = array<i64: 1, 32>}, {transform_indices = @transform_13, window_bounds = array<i64: 1, 64, 32>}]} {
    %c0 = arith.constant 0 : index
    %c0_0 = arith.constant 0 : index
    %c0_1 = arith.constant 0 : index
    %0 = vector.load %arg1[%c0, %c0_0, %c0_1] : memref<1x64x16xf32, #tpu.memory_space<vmem>>, vector<1x64x16xf32>
    %1 = vector.shape_cast %0 : vector<1x64x16xf32> to vector<64x16xf32>
    %c0_2 = arith.constant 0 : index
    %c0_3 = arith.constant 0 : index
    %2 = vector.load %arg2[%c0_2, %c0_3] : memref<16x16xf32, #tpu.memory_space<vmem>>, vector<16x16xf32>
    %c0_4 = arith.constant 0 : index
    %c0_5 = arith.constant 0 : index
    %3 = vector.load %arg3[%c0_4, %c0_5] : memref<1x16xf32, #tpu.memory_space<vmem>>, vector<1x16xf32>
    %c0_6 = arith.constant 0 : index
    %c0_7 = arith.constant 0 : index
    %4 = vector.load %arg4[%c0_6, %c0_7] : memref<1x16xf32, #tpu.memory_space<vmem>>, vector<1x16xf32>
    %cst = arith.constant dense<0.000000e+00> : vector<16xf32>
    %5 = vector.multi_reduction <add>, %1, %cst [0] : vector<64x16xf32> to vector<16xf32>
    %6 = vector.shape_cast %5 : vector<16xf32> to vector<1x16xf32>
    %cst_8 = arith.constant dense<0.000000e+00> : vector<1x16xf32>
    %7 = tpu.matmul %6, %2, %cst_8 {dimension_numbers = #tpu.dot_dimension_numbers<[1], [0], [0], [1], [0, 0, 1, 1], [], []>} : vector<1x16xf32>, vector<16x16xf32>, vector<1x16xf32> -> vector<1x16xf32>
    %8 = vector.broadcast %7 : vector<1x16xf32> to vector<64x16xf32>
    %9 = arith.subf %1, %8 : vector<64x16xf32>
    %10 = arith.mulf %9, %9 : vector<64x16xf32>
    %cst_9 = arith.constant dense<0.000000e+00> : vector<16xf32>
    %11 = vector.multi_reduction <add>, %10, %cst_9 [0] : vector<64x16xf32> to vector<16xf32>
    %12 = vector.shape_cast %11 : vector<16xf32> to vector<1x16xf32>
    %cst_10 = arith.constant dense<0.000000e+00> : vector<1x16xf32>
    %13 = tpu.matmul %12, %2, %cst_10 {dimension_numbers = #tpu.dot_dimension_numbers<[1], [0], [0], [1], [0, 0, 1, 1], [], []>} : vector<1x16xf32>, vector<16x16xf32>, vector<1x16xf32> -> vector<1x16xf32>
    %cst_11 = arith.constant 9.99999974E-6 : f32
    %14 = vector.broadcast %cst_11 : f32 to vector<1x16xf32>
    %15 = arith.addf %13, %14 : vector<1x16xf32>
    %16 = math.rsqrt %15 : vector<1x16xf32>
    %17 = arith.mulf %16, %3 : vector<1x16xf32>
    %18 = vector.broadcast %17 : vector<1x16xf32> to vector<64x16xf32>
    %19 = arith.mulf %9, %18 : vector<64x16xf32>
    %20 = vector.broadcast %4 : vector<1x16xf32> to vector<64x16xf32>
    %21 = arith.addf %19, %20 : vector<64x16xf32>
    %22 = arith.negf %21 : vector<64x16xf32>
    %23 = math.exp %22 : vector<64x16xf32>
    %cst_12 = arith.constant 1.000000e+00 : f32
    %24 = vector.broadcast %cst_12 : f32 to vector<64x16xf32>
    %25 = arith.addf %24, %23 : vector<64x16xf32>
    %26 = arith.divf %24, %25 : vector<64x16xf32>
    %27 = arith.mulf %21, %26 : vector<64x16xf32>
    %c0_13 = arith.constant 0 : index
    %c0_14 = arith.constant 0 : index
    %28 = vector.load %arg6[%c0_13, %c0_14] : memref<1x32xf32, #tpu.memory_space<vmem>>, vector<1x32xf32>
    %29 = tpu.iota {dimensions = array<i32: 0>} : vector<64x1xi32>
    %c1_i32 = arith.constant 1 : i32
    %30 = tpu.dynamic_rotate %27 by %c1_i32 dim 0 : vector<64x16xf32>, i32 -> vector<64x16xf32>
    %c-1_i32 = arith.constant -1 : i32
    %31 = vector.broadcast %c-1_i32 : i32 to vector<64x1xi32>
    %32 = arith.addi %29, %31 : vector<64x1xi32>
    %c0_i32 = arith.constant 0 : i32
    %33 = vector.broadcast %c0_i32 : i32 to vector<64x1xi32>
    %34 = arith.cmpi sge, %32, %33 : vector<64x1xi32>
    %c-1_i32_15 = arith.constant -1 : i32
    %35 = vector.broadcast %c-1_i32_15 : i32 to vector<64x1xi32>
    %36 = arith.addi %29, %35 : vector<64x1xi32>
    %c64_i32 = arith.constant 64 : i32
    %37 = vector.broadcast %c64_i32 : i32 to vector<64x1xi32>
    %38 = arith.cmpi slt, %36, %37 : vector<64x1xi32>
    %39 = arith.andi %34, %38 : vector<64x1xi1>
    %cst_16 = arith.constant 0.000000e+00 : f32
    %40 = vector.shape_cast %39 : vector<64x1xi1> to vector<64x1xi1>
    %41 = vector.broadcast %40 : vector<64x1xi1> to vector<64x16xi1>
    %42 = vector.broadcast %cst_16 : f32 to vector<64x16xf32>
    %43 = arith.select %41, %30, %42 : vector<64x16xi1>, vector<64x16xf32>
    %44 = arith.truncf %43 : vector<64x16xf32> to vector<64x16xbf16>
    %c0_17 = arith.constant 0 : index
    %c0_18 = arith.constant 0 : index
    %c0_19 = arith.constant 0 : index
    %45 = vector.load %arg5[%c0_17, %c0_18, %c0_19] : memref<3x16x32xbf16, #tpu.memory_space<vmem>>, vector<1x16x32xbf16>
    %46 = vector.shape_cast %45 : vector<1x16x32xbf16> to vector<16x32xbf16>
    %cst_20 = arith.constant dense<0.000000e+00> : vector<64x32xf32>
    %47 = tpu.matmul %44, %46, %cst_20 {dimension_numbers = #tpu.dot_dimension_numbers<[1], [0], [0], [1], [0, 0, 1, 1], [], []>} : vector<64x16xbf16>, vector<16x32xbf16>, vector<64x32xf32> -> vector<64x32xf32>
    %48 = arith.truncf %27 : vector<64x16xf32> to vector<64x16xbf16>
    %c1 = arith.constant 1 : index
    %c0_21 = arith.constant 0 : index
    %c0_22 = arith.constant 0 : index
    %49 = vector.load %arg5[%c1, %c0_21, %c0_22] : memref<3x16x32xbf16, #tpu.memory_space<vmem>>, vector<1x16x32xbf16>
    %50 = vector.shape_cast %49 : vector<1x16x32xbf16> to vector<16x32xbf16>
    %cst_23 = arith.constant dense<0.000000e+00> : vector<64x32xf32>
    %51 = tpu.matmul %48, %50, %cst_23 {dimension_numbers = #tpu.dot_dimension_numbers<[1], [0], [0], [1], [0, 0, 1, 1], [], []>} : vector<64x16xbf16>, vector<16x32xbf16>, vector<64x32xf32> -> vector<64x32xf32>
    %52 = arith.addf %47, %51 : vector<64x32xf32>
    %c63_i32 = arith.constant 63 : i32
    %53 = tpu.dynamic_rotate %27 by %c63_i32 dim 0 : vector<64x16xf32>, i32 -> vector<64x16xf32>
    %c1_i32_24 = arith.constant 1 : i32
    %54 = vector.broadcast %c1_i32_24 : i32 to vector<64x1xi32>
    %55 = arith.addi %29, %54 : vector<64x1xi32>
    %c0_i32_25 = arith.constant 0 : i32
    %56 = vector.broadcast %c0_i32_25 : i32 to vector<64x1xi32>
    %57 = arith.cmpi sge, %55, %56 : vector<64x1xi32>
    %c1_i32_26 = arith.constant 1 : i32
    %58 = vector.broadcast %c1_i32_26 : i32 to vector<64x1xi32>
    %59 = arith.addi %29, %58 : vector<64x1xi32>
    %c64_i32_27 = arith.constant 64 : i32
    %60 = vector.broadcast %c64_i32_27 : i32 to vector<64x1xi32>
    %61 = arith.cmpi slt, %59, %60 : vector<64x1xi32>
    %62 = arith.andi %57, %61 : vector<64x1xi1>
    %cst_28 = arith.constant 0.000000e+00 : f32
    %63 = vector.shape_cast %62 : vector<64x1xi1> to vector<64x1xi1>
    %64 = vector.broadcast %63 : vector<64x1xi1> to vector<64x16xi1>
    %65 = vector.broadcast %cst_28 : f32 to vector<64x16xf32>
    %66 = arith.select %64, %53, %65 : vector<64x16xi1>, vector<64x16xf32>
    %67 = arith.truncf %66 : vector<64x16xf32> to vector<64x16xbf16>
    %c2 = arith.constant 2 : index
    %c0_29 = arith.constant 0 : index
    %c0_30 = arith.constant 0 : index
    %68 = vector.load %arg5[%c2, %c0_29, %c0_30] : memref<3x16x32xbf16, #tpu.memory_space<vmem>>, vector<1x16x32xbf16>
    %69 = vector.shape_cast %68 : vector<1x16x32xbf16> to vector<16x32xbf16>
    %cst_31 = arith.constant dense<0.000000e+00> : vector<64x32xf32>
    %70 = tpu.matmul %67, %69, %cst_31 {dimension_numbers = #tpu.dot_dimension_numbers<[1], [0], [0], [1], [0, 0, 1, 1], [], []>} : vector<64x16xbf16>, vector<16x32xbf16>, vector<64x32xf32> -> vector<64x32xf32>
    %71 = arith.addf %52, %70 : vector<64x32xf32>
    %72 = vector.broadcast %28 : vector<1x32xf32> to vector<64x32xf32>
    %73 = arith.addf %71, %72 : vector<64x32xf32>
    %c0_32 = arith.constant 0 : index
    %c0_33 = arith.constant 0 : index
    %74 = vector.load %arg7[%c0_32, %c0_33] : memref<32x32xf32, #tpu.memory_space<vmem>>, vector<32x32xf32>
    %c0_34 = arith.constant 0 : index
    %c0_35 = arith.constant 0 : index
    %75 = vector.load %arg8[%c0_34, %c0_35] : memref<1x32xf32, #tpu.memory_space<vmem>>, vector<1x32xf32>
    %c0_36 = arith.constant 0 : index
    %c0_37 = arith.constant 0 : index
    %76 = vector.load %arg9[%c0_36, %c0_37] : memref<1x32xf32, #tpu.memory_space<vmem>>, vector<1x32xf32>
    %cst_38 = arith.constant dense<0.000000e+00> : vector<32xf32>
    %77 = vector.multi_reduction <add>, %73, %cst_38 [0] : vector<64x32xf32> to vector<32xf32>
    %78 = vector.shape_cast %77 : vector<32xf32> to vector<1x32xf32>
    %cst_39 = arith.constant dense<0.000000e+00> : vector<1x32xf32>
    %79 = tpu.matmul %78, %74, %cst_39 {dimension_numbers = #tpu.dot_dimension_numbers<[1], [0], [0], [1], [0, 0, 1, 1], [], []>} : vector<1x32xf32>, vector<32x32xf32>, vector<1x32xf32> -> vector<1x32xf32>
    %80 = vector.broadcast %79 : vector<1x32xf32> to vector<64x32xf32>
    %81 = arith.subf %73, %80 : vector<64x32xf32>
    %82 = arith.mulf %81, %81 : vector<64x32xf32>
    %cst_40 = arith.constant dense<0.000000e+00> : vector<32xf32>
    %83 = vector.multi_reduction <add>, %82, %cst_40 [0] : vector<64x32xf32> to vector<32xf32>
    %84 = vector.shape_cast %83 : vector<32xf32> to vector<1x32xf32>
    %cst_41 = arith.constant dense<0.000000e+00> : vector<1x32xf32>
    %85 = tpu.matmul %84, %74, %cst_41 {dimension_numbers = #tpu.dot_dimension_numbers<[1], [0], [0], [1], [0, 0, 1, 1], [], []>} : vector<1x32xf32>, vector<32x32xf32>, vector<1x32xf32> -> vector<1x32xf32>
    %cst_42 = arith.constant 9.99999974E-6 : f32
    %86 = vector.broadcast %cst_42 : f32 to vector<1x32xf32>
    %87 = arith.addf %85, %86 : vector<1x32xf32>
    %88 = math.rsqrt %87 : vector<1x32xf32>
    %89 = arith.mulf %88, %75 : vector<1x32xf32>
    %90 = vector.broadcast %89 : vector<1x32xf32> to vector<64x32xf32>
    %91 = arith.mulf %81, %90 : vector<64x32xf32>
    %92 = vector.broadcast %76 : vector<1x32xf32> to vector<64x32xf32>
    %93 = arith.addf %91, %92 : vector<64x32xf32>
    %94 = arith.negf %93 : vector<64x32xf32>
    %95 = math.exp %94 : vector<64x32xf32>
    %cst_43 = arith.constant 1.000000e+00 : f32
    %96 = vector.broadcast %cst_43 : f32 to vector<64x32xf32>
    %97 = arith.addf %96, %95 : vector<64x32xf32>
    %98 = arith.divf %96, %97 : vector<64x32xf32>
    %99 = arith.mulf %93, %98 : vector<64x32xf32>
    %c0_44 = arith.constant 0 : index
    %c0_45 = arith.constant 0 : index
    %100 = vector.load %arg11[%c0_44, %c0_45] : memref<1x32xf32, #tpu.memory_space<vmem>>, vector<1x32xf32>
    %101 = tpu.iota {dimensions = array<i32: 0>} : vector<64x1xi32>
    %c1_i32_46 = arith.constant 1 : i32
    %102 = tpu.dynamic_rotate %99 by %c1_i32_46 dim 0 : vector<64x32xf32>, i32 -> vector<64x32xf32>
    %c-1_i32_47 = arith.constant -1 : i32
    %103 = vector.broadcast %c-1_i32_47 : i32 to vector<64x1xi32>
    %104 = arith.addi %101, %103 : vector<64x1xi32>
    %c0_i32_48 = arith.constant 0 : i32
    %105 = vector.broadcast %c0_i32_48 : i32 to vector<64x1xi32>
    %106 = arith.cmpi sge, %104, %105 : vector<64x1xi32>
    %c-1_i32_49 = arith.constant -1 : i32
    %107 = vector.broadcast %c-1_i32_49 : i32 to vector<64x1xi32>
    %108 = arith.addi %101, %107 : vector<64x1xi32>
    %c64_i32_50 = arith.constant 64 : i32
    %109 = vector.broadcast %c64_i32_50 : i32 to vector<64x1xi32>
    %110 = arith.cmpi slt, %108, %109 : vector<64x1xi32>
    %111 = arith.andi %106, %110 : vector<64x1xi1>
    %cst_51 = arith.constant 0.000000e+00 : f32
    %112 = vector.shape_cast %111 : vector<64x1xi1> to vector<64x1xi1>
    %113 = vector.broadcast %112 : vector<64x1xi1> to vector<64x32xi1>
    %114 = vector.broadcast %cst_51 : f32 to vector<64x32xf32>
    %115 = arith.select %113, %102, %114 : vector<64x32xi1>, vector<64x32xf32>
    %116 = arith.truncf %115 : vector<64x32xf32> to vector<64x32xbf16>
    %c0_52 = arith.constant 0 : index
    %c0_53 = arith.constant 0 : index
    %c0_54 = arith.constant 0 : index
    %117 = vector.load %arg10[%c0_52, %c0_53, %c0_54] : memref<3x32x32xbf16, #tpu.memory_space<vmem>>, vector<1x32x32xbf16>
    %118 = vector.shape_cast %117 : vector<1x32x32xbf16> to vector<32x32xbf16>
    %cst_55 = arith.constant dense<0.000000e+00> : vector<64x32xf32>
    %119 = tpu.matmul %116, %118, %cst_55 {dimension_numbers = #tpu.dot_dimension_numbers<[1], [0], [0], [1], [0, 0, 1, 1], [], []>} : vector<64x32xbf16>, vector<32x32xbf16>, vector<64x32xf32> -> vector<64x32xf32>
    %120 = arith.truncf %99 : vector<64x32xf32> to vector<64x32xbf16>
    %c1_56 = arith.constant 1 : index
    %c0_57 = arith.constant 0 : index
    %c0_58 = arith.constant 0 : index
    %121 = vector.load %arg10[%c1_56, %c0_57, %c0_58] : memref<3x32x32xbf16, #tpu.memory_space<vmem>>, vector<1x32x32xbf16>
    %122 = vector.shape_cast %121 : vector<1x32x32xbf16> to vector<32x32xbf16>
    %cst_59 = arith.constant dense<0.000000e+00> : vector<64x32xf32>
    %123 = tpu.matmul %120, %122, %cst_59 {dimension_numbers = #tpu.dot_dimension_numbers<[1], [0], [0], [1], [0, 0, 1, 1], [], []>} : vector<64x32xbf16>, vector<32x32xbf16>, vector<64x32xf32> -> vector<64x32xf32>
    %124 = arith.addf %119, %123 : vector<64x32xf32>
    %c63_i32_60 = arith.constant 63 : i32
    %125 = tpu.dynamic_rotate %99 by %c63_i32_60 dim 0 : vector<64x32xf32>, i32 -> vector<64x32xf32>
    %c1_i32_61 = arith.constant 1 : i32
    %126 = vector.broadcast %c1_i32_61 : i32 to vector<64x1xi32>
    %127 = arith.addi %101, %126 : vector<64x1xi32>
    %c0_i32_62 = arith.constant 0 : i32
    %128 = vector.broadcast %c0_i32_62 : i32 to vector<64x1xi32>
    %129 = arith.cmpi sge, %127, %128 : vector<64x1xi32>
    %c1_i32_63 = arith.constant 1 : i32
    %130 = vector.broadcast %c1_i32_63 : i32 to vector<64x1xi32>
    %131 = arith.addi %101, %130 : vector<64x1xi32>
    %c64_i32_64 = arith.constant 64 : i32
    %132 = vector.broadcast %c64_i32_64 : i32 to vector<64x1xi32>
    %133 = arith.cmpi slt, %131, %132 : vector<64x1xi32>
    %134 = arith.andi %129, %133 : vector<64x1xi1>
    %cst_65 = arith.constant 0.000000e+00 : f32
    %135 = vector.shape_cast %134 : vector<64x1xi1> to vector<64x1xi1>
    %136 = vector.broadcast %135 : vector<64x1xi1> to vector<64x32xi1>
    %137 = vector.broadcast %cst_65 : f32 to vector<64x32xf32>
    %138 = arith.select %136, %125, %137 : vector<64x32xi1>, vector<64x32xf32>
    %139 = arith.truncf %138 : vector<64x32xf32> to vector<64x32xbf16>
    %c2_66 = arith.constant 2 : index
    %c0_67 = arith.constant 0 : index
    %c0_68 = arith.constant 0 : index
    %140 = vector.load %arg10[%c2_66, %c0_67, %c0_68] : memref<3x32x32xbf16, #tpu.memory_space<vmem>>, vector<1x32x32xbf16>
    %141 = vector.shape_cast %140 : vector<1x32x32xbf16> to vector<32x32xbf16>
    %cst_69 = arith.constant dense<0.000000e+00> : vector<64x32xf32>
    %142 = tpu.matmul %139, %141, %cst_69 {dimension_numbers = #tpu.dot_dimension_numbers<[1], [0], [0], [1], [0, 0, 1, 1], [], []>} : vector<64x32xbf16>, vector<32x32xbf16>, vector<64x32xf32> -> vector<64x32xf32>
    %143 = arith.addf %124, %142 : vector<64x32xf32>
    %144 = vector.broadcast %100 : vector<1x32xf32> to vector<64x32xf32>
    %145 = arith.addf %143, %144 : vector<64x32xf32>
    %146 = arith.truncf %1 : vector<64x16xf32> to vector<64x16xbf16>
    %c0_70 = arith.constant 0 : index
    %c0_71 = arith.constant 0 : index
    %147 = vector.load %arg12[%c0_70, %c0_71] : memref<16x32xbf16, #tpu.memory_space<vmem>>, vector<16x32xbf16>
    %cst_72 = arith.constant dense<0.000000e+00> : vector<64x32xf32>
    %148 = tpu.matmul %146, %147, %cst_72 {dimension_numbers = #tpu.dot_dimension_numbers<[1], [0], [0], [1], [0, 0, 1, 1], [], []>} : vector<64x16xbf16>, vector<16x32xbf16>, vector<64x32xf32> -> vector<64x32xf32>
    %c0_73 = arith.constant 0 : index
    %c0_74 = arith.constant 0 : index
    %149 = vector.load %arg13[%c0_73, %c0_74] : memref<1x32xf32, #tpu.memory_space<vmem>>, vector<1x32xf32>
    %150 = vector.broadcast %149 : vector<1x32xf32> to vector<64x32xf32>
    %151 = arith.addf %148, %150 : vector<64x32xf32>
    %152 = arith.addf %151, %145 : vector<64x32xf32>
    %c0_75 = arith.constant 0 : index
    %c0_76 = arith.constant 0 : index
    %c0_77 = arith.constant 0 : index
    %153 = vector.load %arg14[%c0_75, %c0_76, %c0_77] : memref<1x64x32xf32, #tpu.memory_space<vmem>>, vector<1x64x32xf32>
    %154 = vector.shape_cast %153 : vector<1x64x32xf32> to vector<64x32xf32>
    %155 = vector.shape_cast %152 : vector<64x32xf32> to vector<1x64x32xf32>
    tpu.vector_store %arg14[%c0_75, %c0_76, %c0_77], %155 {strides = array<i32>} : memref<1x64x32xf32, #tpu.memory_space<vmem>>, vector<1x64x32xf32>,
    return
  }
  func.func @transform_0(%arg0: i32) -> (i32, i32, i32) {
    %c0_i32 = arith.constant 0 : i32
    %c0_i32_0 = arith.constant 0 : i32
    %c0_i32_1 = arith.constant 0 : i32
    return %arg0, %c0_i32, %c0_i32_0 : i32, i32, i32
  }
  func.func @transform_1(%arg0: i32) -> (i32, i32) {
    %c0_i32 = arith.constant 0 : i32
    %c0_i32_0 = arith.constant 0 : i32
    %c0_i32_1 = arith.constant 0 : i32
    return %c0_i32, %c0_i32_0 : i32, i32
  }
  func.func @transform_2(%arg0: i32) -> (i32, i32) {
    %c0_i32 = arith.constant 0 : i32
    %c0_i32_0 = arith.constant 0 : i32
    %c0_i32_1 = arith.constant 0 : i32
    return %c0_i32, %c0_i32_0 : i32, i32
  }
  func.func @transform_3(%arg0: i32) -> (i32, i32) {
    %c0_i32 = arith.constant 0 : i32
    %c0_i32_0 = arith.constant 0 : i32
    %c0_i32_1 = arith.constant 0 : i32
    return %c0_i32, %c0_i32_0 : i32, i32
  }
  func.func @transform_4(%arg0: i32) -> (i32, i32, i32) {
    %c0_i32 = arith.constant 0 : i32
    %c0_i32_0 = arith.constant 0 : i32
    %c0_i32_1 = arith.constant 0 : i32
    %c0_i32_2 = arith.constant 0 : i32
    return %c0_i32, %c0_i32_0, %c0_i32_1 : i32, i32, i32
  }
  func.func @transform_5(%arg0: i32) -> (i32, i32) {
    %c0_i32 = arith.constant 0 : i32
    %c0_i32_0 = arith.constant 0 : i32
    %c0_i32_1 = arith.constant 0 : i32
    return %c0_i32, %c0_i32_0 : i32, i32
  }
  func.func @transform_6(%arg0: i32) -> (i32, i32) {
    %c0_i32 = arith.constant 0 : i32
    %c0_i32_0 = arith.constant 0 : i32
    %c0_i32_1 = arith.constant 0 : i32
    return %c0_i32, %c0_i32_0 : i32, i32
  }
  func.func @transform_7(%arg0: i32) -> (i32, i32) {
    %c0_i32 = arith.constant 0 : i32
    %c0_i32_0 = arith.constant 0 : i32
    %c0_i32_1 = arith.constant 0 : i32
    return %c0_i32, %c0_i32_0 : i32, i32
  }
  func.func @transform_8(%arg0: i32) -> (i32, i32) {
    %c0_i32 = arith.constant 0 : i32
    %c0_i32_0 = arith.constant 0 : i32
    %c0_i32_1 = arith.constant 0 : i32
    return %c0_i32, %c0_i32_0 : i32, i32
  }
  func.func @transform_9(%arg0: i32) -> (i32, i32, i32) {
    %c0_i32 = arith.constant 0 : i32
    %c0_i32_0 = arith.constant 0 : i32
    %c0_i32_1 = arith.constant 0 : i32
    %c0_i32_2 = arith.constant 0 : i32
    return %c0_i32, %c0_i32_0, %c0_i32_1 : i32, i32, i32
  }
  func.func @transform_10(%arg0: i32) -> (i32, i32) {
    %c0_i32 = arith.constant 0 : i32
    %c0_i32_0 = arith.constant 0 : i32
    %c0_i32_1 = arith.constant 0 : i32
    return %c0_i32, %c0_i32_0 : i32, i32
  }
  func.func @transform_11(%arg0: i32) -> (i32, i32) {
    %c0_i32 = arith.constant 0 : i32
    %c0_i32_0 = arith.constant 0 : i32
    %c0_i32_1 = arith.constant 0 : i32
    return %c0_i32, %c0_i32_0 : i32, i32
  }
  func.func @transform_12(%arg0: i32) -> (i32, i32) {
    %c0_i32 = arith.constant 0 : i32
    %c0_i32_0 = arith.constant 0 : i32
    %c0_i32_1 = arith.constant 0 : i32
    return %c0_i32, %c0_i32_0 : i32, i32
  }
  func.func @transform_13(%arg0: i32) -> (i32, i32, i32) {
    %c0_i32 = arith.constant 0 : i32
    %c0_i32_0 = arith.constant 0 : i32
    %c0_i32_1 = arith.constant 0 : i32
    return %arg0, %c0_i32, %c0_i32_0 : i32, i32, i32
  }
}

</mosaic_0001>

<llo_original>
// kernel: tpu_custom_call.1
$region0: #{tpu_custom_call.1}
  #allocation0 [shape = 'u32[]', space=smem, size = 0x4, offset = 0x4, fixed_abs, tag = 'smem constant byte address 0x4 - core index']
  #allocation1 [shape = 'u32[72,128]{1,0:T(1,128)}', space=vmem, size = 0x9000, scoped, tag = 'internal scratch']
  %s0 = inlined_call_operand.vmem [shape: f32[2,64,16], index: 0, kind: input, shape index: {}]
  %s1 = inlined_call_operand.vmem [shape: f32[16,16], index: 1, kind: input, shape index: {}]
  %s2 = inlined_call_operand.vmem [shape: f32[1,16], index: 2, kind: input, shape index: {}]
  %s3 = inlined_call_operand.vmem [shape: f32[1,16], index: 3, kind: input, shape index: {}]
  %s4 = inlined_call_operand.vmem [shape: bf16[3,16,32], index: 4, kind: input, shape index: {}]
  %s5 = inlined_call_operand.vmem [shape: f32[1,32], index: 5, kind: input, shape index: {}]
  %s6 = inlined_call_operand.vmem [shape: f32[32,32], index: 6, kind: input, shape index: {}]
  %s7 = inlined_call_operand.vmem [shape: f32[1,32], index: 7, kind: input, shape index: {}]
  %s8 = inlined_call_operand.vmem [shape: f32[1,32], index: 8, kind: input, shape index: {}]
  %s9 = inlined_call_operand.vmem [shape: bf16[3,32,32], index: 9, kind: input, shape index: {}]
  %s10 = inlined_call_operand.vmem [shape: f32[1,32], index: 10, kind: input, shape index: {}]
  %s11 = inlined_call_operand.vmem [shape: bf16[16,32], index: 11, kind: input, shape index: {}]
  %s12 = inlined_call_operand.vmem [shape: f32[1,32], index: 12, kind: input, shape index: {}]
  %s13 = inlined_call_operand.vmem [shape: f32[2,64,32], index: 13, kind: output, shape index: {}]
  %s14 = sld [smem:[#allocation0]]
  $region85: #{tpu_custom_call.1} parent=0
    _
  %s16 = ssub.s32 1, %s14
  %s17 = scalar_select 0, %s16, %s14
  loop: start=0, step=1, limit=4
  $region2: #{tpu_custom_call.1} parent=0 // loop_pre_header
    _
  $region3: #{tpu_custom_call.1} parent=0 // loop_header
    %s19 = sphi 0, %s23
    %p20 = scmp.ge.s32.totalorder %s19, 4
    %s29 = sphi 0, %s31
    %s32 = sphi 0, %s29
    %s33 = sphi 0, %s32
    %s49 = sphi 0, %s33
    %s53 = sphi 0, %s53
    %s55 = sphi 0, %s53
    %s56 = sphi 0, %s55
    %s70 = sphi 0, %s56
    %s74 = sphi 0, %s74
    %s76 = sphi 0, %s74
    %s77 = sphi 0, %s76
    %s91 = sphi 0, %s77
    %s95 = sphi 0, %s95
    %s97 = sphi 0, %s95
    %s98 = sphi 0, %s97
    %s112 = sphi 0, %s98
    %s116 = sphi 0, %s116
    %s118 = sphi 0, %s116
    %s119 = sphi 0, %s118
    %s133 = sphi 0, %s119
    %s137 = sphi 0, %s137
    %s139 = sphi 0, %s137
    %s140 = sphi 0, %s139
    %s154 = sphi 0, %s140
    %s158 = sphi 0, %s158
    %s160 = sphi 0, %s158
    %s161 = sphi 0, %s160
    %s175 = sphi 0, %s161
    %s179 = sphi 0, %s179
    %s181 = sphi 0, %s179
    %s182 = sphi 0, %s181
    %s196 = sphi 0, %s182
    %s200 = sphi 0, %s200
    %s202 = sphi 0, %s200
    %s203 = sphi 0, %s202
    %s217 = sphi 0, %s203
    %s221 = sphi 0, %s221
    %s223 = sphi 0, %s221
    %s224 = sphi 0, %s223
    %s238 = sphi 0, %s224
    %s242 = sphi 0, %s242
    %s244 = sphi 0, %s242
    %s245 = sphi 0, %s244
    %s259 = sphi 0, %s245
    %s263 = sphi 0, %s263
    %s265 = sphi 0, %s263
    %s266 = sphi 0, %s265
    %s280 = sphi 0, %s266
    %s284 = sphi 0, %s284
    %s286 = sphi 0, %s284
    %s287 = sphi 0, %s286
    %s301 = sphi 0, %s287
    %s307 = sphi 0, %s309
    %s310 = sphi 0, %s307
    %s311 = sphi 0, %s310
    %s327 = sphi 0, %s311
  $region4: #{tpu_custom_call.1} parent=0 // loop_header_branch
    %22 = sbr.rel (%p20) target = $region8
  $region5: #{tpu_custom_call.1} parent=0 // loop_body
    %s24 = ssub.s32 %s19, 1
    %s25 = ssub.s32 %s19, 2
    %s26 = sadd.s32 %s19, 1
    %s27 = ssub.s32 %s19, %s26
    %p28 = scmp.eq.s32.totalorder %s27, 0
    %s30 = sadd.s32 %s29, 1
    %s31 = scalar_select %p28, %s29, %s30
    %p34 = pneg %p28
    %p35 = scmp.eq.s32.totalorder %s19, 1
    %p36 = por %p34, %p35
    %p37 = scmp.ne.s32.totalorder %s29, %s32
    %p38 = scmp.eq.s32.totalorder %s19, 0
    %p39 = por %p37, %p38
    %p40 = scmp.ne.s32.totalorder %s29, %s32
    %p41 = scmp.eq.s32.totalorder %s24, 1
    %p42 = por %p40, %p41
    %p43 = scmp.ne.s32.totalorder %s32, %s33
    %p44 = scmp.eq.s32.totalorder %s24, 0
    %p45 = por %p43, %p44
    %p46 = scmp.ne.s32.totalorder %s32, %s33
    %p47 = scmp.eq.s32.totalorder %s25, 1
    %p48 = por %p46, %p47
    %p50 = scmp.ne.s32.totalorder %s33, %s49
    %p51 = scmp.eq.s32.totalorder %s25, 0
    %p52 = por %p50, %p51
    %s54 = sadd.s32 %s53, 1
    %p57 = scmp.eq.s32.totalorder %s19, 1
    %p58 = scmp.ne.s32.totalorder %s53, %s55
    %p59 = scmp.eq.s32.totalorder %s19, 0
    %p60 = por %p58, %p59
    %p61 = scmp.ne.s32.totalorder %s53, %s55
    %p62 = scmp.eq.s32.totalorder %s24, 1
    %p63 = por %p61, %p62
    %p64 = scmp.ne.s32.totalorder %s55, %s56
    %p65 = scmp.eq.s32.totalorder %s24, 0
    %p66 = por %p64, %p65
    %p67 = scmp.ne.s32.totalorder %s55, %s56
    %p68 = scmp.eq.s32.totalorder %s25, 1
    %p69 = por %p67, %p68
    %p71 = scmp.ne.s32.totalorder %s56, %s70
    %p72 = scmp.eq.s32.totalorder %s25, 0
    %p73 = por %p71, %p72
    %s75 = sadd.s32 %s74, 1
    %p78 = scmp.eq.s32.totalorder %s19, 1
    %p79 = scmp.ne.s32.totalorder %s74, %s76
    %p80 = scmp.eq.s32.totalorder %s19, 0
    %p81 = por %p79, %p80
    %p82 = scmp.ne.s32.totalorder %s74, %s76
    %p83 = scmp.eq.s32.totalorder %s24, 1
    %p84 = por %p82, %p83
    %p85 = scmp.ne.s32.totalorder %s76, %s77
    %p86 = scmp.eq.s32.totalorder %s24, 0
    %p87 = por %p85, %p86
    %p88 = scmp.ne.s32.totalorder %s76, %s77
    %p89 = scmp.eq.s32.totalorder %s25, 1
    %p90 = por %p88, %p89
    %p92 = scmp.ne.s32.totalorder %s77, %s91
    %p93 = scmp.eq.s32.totalorder %s25, 0
    %p94 = por %p92, %p93
    %s96 = sadd.s32 %s95, 1
    %p99 = scmp.eq.s32.totalorder %s19, 1
    %p100 = scmp.ne.s32.totalorder %s95, %s97
    %p101 = scmp.eq.s32.totalorder %s19, 0
    %p102 = por %p100, %p101
    %p103 = scmp.ne.s32.totalorder %s95, %s97
    %p104 = scmp.eq.s32.totalorder %s24, 1
    %p105 = por %p103, %p104
    %p106 = scmp.ne.s32.totalorder %s97, %s98
    %p107 = scmp.eq.s32.totalorder %s24, 0
    %p108 = por %p106, %p107
    %p109 = scmp.ne.s32.totalorder %s97, %s98
    %p110 = scmp.eq.s32.totalorder %s25, 1
    %p111 = por %p109, %p110
    %p113 = scmp.ne.s32.totalorder %s98, %s112
    %p114 = scmp.eq.s32.totalorder %s25, 0
    %p115 = por %p113, %p114
    %s117 = sadd.s32 %s116, 1
    %p120 = scmp.eq.s32.totalorder %s19, 1
    %p121 = scmp.ne.s32.totalorder %s116, %s118
    %p122 = scmp.eq.s32.totalorder %s19, 0
    %p123 = por %p121, %p122
    %p124 = scmp.ne.s32.totalorder %s116, %s118
    %p125 = scmp.eq.s32.totalorder %s24, 1
    %p126 = por %p124, %p125
    %p127 = scmp.ne.s32.totalorder %s118, %s119
    %p128 = scmp.eq.s32.totalorder %s24, 0
    %p129 = por %p127, %p128
    %p130 = scmp.ne.s32.totalorder %s118, %s119
    %p131 = scmp.eq.s32.totalorder %s25, 1
    %p132 = por %p130, %p131
    %p134 = scmp.ne.s32.totalorder %s119, %s133
    %p135 = scmp.eq.s32.totalorder %s25, 0
    %p136 = por %p134, %p135
    %s138 = sadd.s32 %s137, 1
    %p141 = scmp.eq.s32.totalorder %s19, 1
    %p142 = scmp.ne.s32.totalorder %s137, %s139
    %p143 = scmp.eq.s32.totalorder %s19, 0
    %p144 = por %p142, %p143
    %p145 = scmp.ne.s32.totalorder %s137, %s139
    %p146 = scmp.eq.s32.totalorder %s24, 1
    %p147 = por %p145, %p146
    %p148 = scmp.ne.s32.totalorder %s139, %s140
    %p149 = scmp.eq.s32.totalorder %s24, 0
    %p150 = por %p148, %p149
    %p151 = scmp.ne.s32.totalorder %s139, %s140
    %p152 = scmp.eq.s32.totalorder %s25, 1
    %p153 = por %p151, %p152
    %p155 = scmp.ne.s32.totalorder %s140, %s154
    %p156 = scmp.eq.s32.totalorder %s25, 0
    %p157 = por %p155, %p156
    %s159 = sadd.s32 %s158, 1
    %p162 = scmp.eq.s32.totalorder %s19, 1
    %p163 = scmp.ne.s32.totalorder %s158, %s160
    %p164 = scmp.eq.s32.totalorder %s19, 0
    %p165 = por %p163, %p164
    %p166 = scmp.ne.s32.totalorder %s158, %s160
    %p167 = scmp.eq.s32.totalorder %s24, 1
    %p168 = por %p166, %p167
    %p169 = scmp.ne.s32.totalorder %s160, %s161
    %p170 = scmp.eq.s32.totalorder %s24, 0
    %p171 = por %p169, %p170
    %p172 = scmp.ne.s32.totalorder %s160, %s161
    %p173 = scmp.eq.s32.totalorder %s25, 1
    %p174 = por %p172, %p173
    %p176 = scmp.ne.s32.totalorder %s161, %s175
    %p177 = scmp.eq.s32.totalorder %s25, 0
    %p178 = por %p176, %p177
    %s180 = sadd.s32 %s179, 1
    %p183 = scmp.eq.s32.totalorder %s19, 1
    %p184 = scmp.ne.s32.totalorder %s179, %s181
    %p185 = scmp.eq.s32.totalorder %s19, 0
    %p186 = por %p184, %p185
    %p187 = scmp.ne.s32.totalorder %s179, %s181
    %p188 = scmp.eq.s32.totalorder %s24, 1
    %p189 = por %p187, %p188
    %p190 = scmp.ne.s32.totalorder %s181, %s182
    %p191 = scmp.eq.s32.totalorder %s24, 0
    %p192 = por %p190, %p191
    %p193 = scmp.ne.s32.totalorder %s181, %s182
    %p194 = scmp.eq.s32.totalorder %s25, 1
    %p195 = por %p193, %p194
    %p197 = scmp.ne.s32.totalorder %s182, %s196
    %p198 = scmp.eq.s32.totalorder %s25, 0
    %p199 = por %p197, %p198
    %s201 = sadd.s32 %s200, 1
    %p204 = scmp.eq.s32.totalorder %s19, 1
    %p205 = scmp.ne.s32.totalorder %s200, %s202
    %p206 = scmp.eq.s32.totalorder %s19, 0
    %p207 = por %p205, %p206
    %p208 = scmp.ne.s32.totalorder %s200, %s202
    %p209 = scmp.eq.s32.totalorder %s24, 1
    %p210 = por %p208, %p209
    %p211 = scmp.ne.s32.totalorder %s202, %s203
    %p212 = scmp.eq.s32.totalorder %s24, 0
    %p213 = por %p211, %p212
    %p214 = scmp.ne.s32.totalorder %s202, %s203
    %p215 = scmp.eq.s32.totalorder %s25, 1
    %p216 = por %p214, %p215
    %p218 = scmp.ne.s32.totalorder %s203, %s217
    %p219 = scmp.eq.s32.totalorder %s25, 0
    %p220 = por %p218, %p219
    %s222 = sadd.s32 %s221, 1
    %p225 = scmp.eq.s32.totalorder %s19, 1
    %p226 = scmp.ne.s32.totalorder %s221, %s223
    %p227 = scmp.eq.s32.totalorder %s19, 0
    %p228 = por %p226, %p227
    %p229 = scmp.ne.s32.totalorder %s221, %s223
    %p230 = scmp.eq.s32.totalorder %s24, 1
    %p231 = por %p229, %p230
    %p232 = scmp.ne.s32.totalorder %s223, %s224
    %p233 = scmp.eq.s32.totalorder %s24, 0
    %p234 = por %p232, %p233
    %p235 = scmp.ne.s32.totalorder %s223, %s224
    %p236 = scmp.eq.s32.totalorder %s25, 1
    %p237 = por %p235, %p236
    %p239 = scmp.ne.s32.totalorder %s224, %s238
    %p240 = scmp.eq.s32.totalorder %s25, 0
    %p241 = por %p239, %p240
    %s243 = sadd.s32 %s242, 1
    %p246 = scmp.eq.s32.totalorder %s19, 1
    %p247 = scmp.ne.s32.totalorder %s242, %s244
    %p248 = scmp.eq.s32.totalorder %s19, 0
    %p249 = por %p247, %p248
    %p250 = scmp.ne.s32.totalorder %s242, %s244
    %p251 = scmp.eq.s32.totalorder %s24, 1
    %p252 = por %p250, %p251
    %p253 = scmp.ne.s32.totalorder %s244, %s245
    %p254 = scmp.eq.s32.totalorder %s24, 0
    %p255 = por %p253, %p254
    %p256 = scmp.ne.s32.totalorder %s244, %s245
    %p257 = scmp.eq.s32.totalorder %s25, 1
    %p258 = por %p256, %p257
    %p260 = scmp.ne.s32.totalorder %s245, %s259
    %p261 = scmp.eq.s32.totalorder %s25, 0
    %p262 = por %p260, %p261
    %s264 = sadd.s32 %s263, 1
    %p267 = scmp.eq.s32.totalorder %s19, 1
    %p268 = scmp.ne.s32.totalorder %s263, %s265
    %p269 = scmp.eq.s32.totalorder %s19, 0
    %p270 = por %p268, %p269
    %p271 = scmp.ne.s32.totalorder %s263, %s265
    %p272 = scmp.eq.s32.totalorder %s24, 1
    %p273 = por %p271, %p272
    %p274 = scmp.ne.s32.totalorder %s265, %s266
    %p275 = scmp.eq.s32.totalorder %s24, 0
    %p276 = por %p274, %p275
    %p277 = scmp.ne.s32.totalorder %s265, %s266
    %p278 = scmp.eq.s32.totalorder %s25, 1
    %p279 = por %p277, %p278
    %p281 = scmp.ne.s32.totalorder %s266, %s280
    %p282 = scmp.eq.s32.totalorder %s25, 0
    %p283 = por %p281, %p282
    %s285 = sadd.s32 %s284, 1
    %p288 = scmp.eq.s32.totalorder %s19, 1
    %p289 = scmp.ne.s32.totalorder %s284, %s286
    %p290 = scmp.eq.s32.totalorder %s19, 0
    %p291 = por %p289, %p290
    %p292 = scmp.ne.s32.totalorder %s284, %s286
    %p293 = scmp.eq.s32.totalorder %s24, 1
    %p294 = por %p292, %p293
    %p295 = scmp.ne.s32.totalorder %s286, %s287
    %p296 = scmp.eq.s32.totalorder %s24, 0
    %p297 = por %p295, %p296
    %p298 = scmp.ne.s32.totalorder %s286, %s287
    %p299 = scmp.eq.s32.totalorder %s25, 1
    %p300 = por %p298, %p299
    %p302 = scmp.ne.s32.totalorder %s287, %s301
    %p303 = scmp.eq.s32.totalorder %s25, 0
    %p304 = por %p302, %p303
    %s305 = ssub.s32 %s19, %s26
    %p306 = scmp.eq.s32.totalorder %s305, 0
    %s308 = sadd.s32 %s307, 1
    %s309 = scalar_select %p306, %s307, %s308
    %p312 = pneg %p306
    %p313 = scmp.eq.s32.totalorder %s19, 1
    %p314 = por %p312, %p313
    %p315 = scmp.ne.s32.totalorder %s307, %s310
    %p316 = scmp.eq.s32.totalorder %s19, 0
    %p317 = por %p315, %p316
    %p318 = scmp.ne.s32.totalorder %s307, %s310
    %p319 = scmp.eq.s32.totalorder %s24, 1
    %p320 = por %p318, %p319
    %p321 = scmp.ne.s32.totalorder %s310, %s311
    %p322 = scmp.eq.s32.totalorder %s24, 0
    %p323 = por %p321, %p322
    %p324 = scmp.ne.s32.totalorder %s310, %s311
    %p325 = scmp.eq.s32.totalorder %s25, 1
    %p326 = por %p324, %p325
    %p328 = scmp.ne.s32.totalorder %s311, %s327
    %p329 = scmp.eq.s32.totalorder %s25, 0
    %p330 = por %p328, %p329
    %p331 = scmp.le.s32.totalorder 1, %s19
    %p332 = scmp.lt.s32.totalorder %s19, 3
    %p333 = pnand %p331, %p332
    %p334 = pneg %p333
    // Predicated region
    $region9: #{tpu_custom_call.1} parent=5 // pred_check
      _
    $region10: #{tpu_custom_call.1} parent=5 // pred_check_branch
      %336 = sbr.rel (%p333) target = $region12
    $region11: #{tpu_custom_call.1} parent=5 // pred_region
      %s337 = ssub.s32 %s19, 1
      // Predicated region
      $region13: #{tpu_custom_call.1} parent=11 // pred_check
        %p338 = pneg %p66
      $region14: #{tpu_custom_call.1} parent=11 // pred_check_branch
        %340 = sbr.rel (%p338) target = $region16
      $region15: #{tpu_custom_call.1} parent=11 // pred_region
        _
      $region16: #{tpu_custom_call.1} parent=11 // pred_fallthru
        _
      // Predicated region
      $region17: #{tpu_custom_call.1} parent=11 // pred_check
        %p341 = pneg %p87
      $region18: #{tpu_custom_call.1} parent=11 // pred_check_branch
        %343 = sbr.rel (%p341) target = $region20
      $region19: #{tpu_custom_call.1} parent=11 // pred_region
        _
      $region20: #{tpu_custom_call.1} parent=11 // pred_fallthru
        _
      // Predicated region
      $region21: #{tpu_custom_call.1} parent=11 // pred_check
        %p344 = pneg %p108
      $region22: #{tpu_custom_call.1} parent=11 // pred_check_branch
        %346 = sbr.rel (%p344) target = $region24
      $region23: #{tpu_custom_call.1} parent=11 // pred_region
        _
      $region24: #{tpu_custom_call.1} parent=11 // pred_fallthru
        _
      // Predicated region
      $region25: #{tpu_custom_call.1} parent=11 // pred_check
        %p347 = pneg %p129
      $region26: #{tpu_custom_call.1} parent=11 // pred_check_branch
        %349 = sbr.rel (%p347) target = $region28
      $region27: #{tpu_custom_call.1} parent=11 // pred_region
        _
      $region28: #{tpu_custom_call.1} parent=11 // pred_fallthru
        _
      // Predicated region
      $region29: #{tpu_custom_call.1} parent=11 // pred_check
        %p350 = pneg %p150
      $region30: #{tpu_custom_call.1} parent=11 // pred_check_branch
        %352 = sbr.rel (%p350) target = $region32
      $region31: #{tpu_custom_call.1} parent=11 // pred_region
        _
      $region32: #{tpu_custom_call.1} parent=11 // pred_fallthru
        _
      // Predicated region
      $region33: #{tpu_custom_call.1} parent=11 // pred_check
        %p353 = pneg %p171
      $region34: #{tpu_custom_call.1} parent=11 // pred_check_branch
        %355 = sbr.rel (%p353) target = $region36
      $region35: #{tpu_custom_call.1} parent=11 // pred_region
        _
      $region36: #{tpu_custom_call.1} parent=11 // pred_fallthru
        _
      // Predicated region
      $region37: #{tpu_custom_call.1} parent=11 // pred_check
        %p356 = pneg %p192
      $region38: #{tpu_custom_call.1} parent=11 // pred_check_branch
        %358 = sbr.rel (%p356) target = $region40
      $region39: #{tpu_custom_call.1} parent=11 // pred_region
        _
      $region40: #{tpu_custom_call.1} parent=11 // pred_fallthru
        _
      // Predicated region
      $region41: #{tpu_custom_call.1} parent=11 // pred_check
        %p359 = pneg %p213
      $region42: #{tpu_custom_call.1} parent=11 // pred_check_branch
        %361 = sbr.rel (%p359) target = $region44
      $region43: #{tpu_custom_call.1} parent=11 // pred_region
        _
      $region44: #{tpu_custom_call.1} parent=11 // pred_fallthru
        _
      // Predicated region
      $region45: #{tpu_custom_call.1} parent=11 // pred_check
        %p362 = pneg %p234
      $region46: #{tpu_custom_call.1} parent=11 // pred_check_branch
        %364 = sbr.rel (%p362) target = $region48
      $region47: #{tpu_custom_call.1} parent=11 // pred_region
        _
      $region48: #{tpu_custom_call.1} parent=11 // pred_fallthru
        _
      // Predicated region
      $region49: #{tpu_custom_call.1} parent=11 // pred_check
        %p365 = pneg %p255
      $region50: #{tpu_custom_call.1} parent=11 // pred_check_branch
        %367 = sbr.rel (%p365) target = $region52
      $region51: #{tpu_custom_call.1} parent=11 // pred_region
        _
      $region52: #{tpu_custom_call.1} parent=11 // pred_fallthru
        _
      // Predicated region
      $region53: #{tpu_custom_call.1} parent=11 // pred_check
        %p368 = pneg %p276
      $region54: #{tpu_custom_call.1} parent=11 // pred_check_branch
        %370 = sbr.rel (%p368) target = $region56
      $region55: #{tpu_custom_call.1} parent=11 // pred_region
        _
      $region56: #{tpu_custom_call.1} parent=11 // pred_fallthru
        _
      // Predicated region
      $region57: #{tpu_custom_call.1} parent=11 // pred_check
        %p371 = pneg %p297
      $region58: #{tpu_custom_call.1} parent=11 // pred_check_branch
        %373 = sbr.rel (%p371) target = $region60
      $region59: #{tpu_custom_call.1} parent=11 // pred_region
        _
      $region60: #{tpu_custom_call.1} parent=11 // pred_fallthru
        _
    $region12: #{tpu_custom_call.1} parent=5 // pred_fallthru
      _
    %p374 = scmp.lt.s32.totalorder %s19, 2
    // Predicated region
    $region61: #{tpu_custom_call.1} parent=5 // pred_check
      %p375 = pneg %p374
    $region62: #{tpu_custom_call.1} parent=5 // pred_check_branch
      %377 = sbr.rel (%p375) target = $region64
    $region63: #{tpu_custom_call.1} parent=5 // pred_region
      // Predicated region
      $region65: #{tpu_custom_call.1} parent=63 // pred_check
        %p378 = pneg %p39
      $region66: #{tpu_custom_call.1} parent=63 // pred_check_branch
        %380 = sbr.rel (%p378) target = $region68
      $region67: #{tpu_custom_call.1} parent=63 // pred_region
        %p381 = scmp.lt.s32.totalorder %s19, 1
        %s382 = scalar_select %p381, %s19, 1
        %s383 = smul.addr %s382, 8
        %s384 = smul.addr %s383, 8
        %s385 = scalar_lea.vmem %s0, %s384
      $region68: #{tpu_custom_call.1} parent=63 // pred_fallthru
        _
    $region64: #{tpu_custom_call.1} parent=5 // pred_fallthru
      _
    %p386 = scmp.le.s32.totalorder 1, %s19
    %p387 = scmp.lt.s32.totalorder %s19, 3
    %p388 = pnand %p386, %p387
    %p389 = pneg %p388
    // Predicated region
    $region69: #{tpu_custom_call.1} parent=5 // pred_check
      _
    $region70: #{tpu_custom_call.1} parent=5 // pred_check_branch
      %391 = sbr.rel (%p388) target = $region72
    $region71: #{tpu_custom_call.1} parent=5 // pred_region
      %s392 = ssub.s32 %s19, 1
      %p393 = scmp.lt.s32.totalorder %s24, 1
      %s394 = scalar_select %p393, %s24, 1
      %s395 = smul.addr %s394, 8
      %s396 = smul.addr %s395, 8
      %s397 = scalar_lea.vmem %s0, %s396
      %p398 = pneg %p45
      %p399 = pneg %p42
      %p400 = pneg %p66
      %p401 = pneg %p63
      %p402 = pneg %p87
      %p403 = pneg %p84
      %p404 = pneg %p108
      %p405 = pneg %p105
      %p406 = pneg %p129
      %p407 = pneg %p126
      %p408 = pneg %p150
      %p409 = pneg %p147
      %p410 = pneg %p171
      %p411 = pneg %p168
      %p412 = pneg %p192
      %p413 = pneg %p189
      %p414 = pneg %p213
      %p415 = pneg %p210
      %p416 = pneg %p234
      %p417 = pneg %p231
      %p418 = pneg %p255
      %p419 = pneg %p252
      %p420 = pneg %p276
      %p421 = pneg %p273
      %p422 = pneg %p297
      %p423 = pneg %p294
      %p424 = pneg %p323
      %p425 = pneg %p320
      %p426 = scmp.lt.s32.totalorder %s24, 1
      %s427 = scalar_select %p426, %s24, 1
      %s428 = smul.addr %s427, 8
      %s429 = smul.addr %s428, 8
      %s430 = scalar_lea.vmem %s13, %s429
      %p431 = scmp.lt.s32.totalorder %s24, 1
      %s432 = scalar_select %p431, %s24, 1
      %s433 = smul.addr %s432, 8
      %s434 = smul.addr %s433, 8
      %s435 = scalar_lea.vmem %s0, %s434
      %p436 = scmp.lt.s32.totalorder %s24, 1
      %s437 = scalar_select %p436, %s24, 1
      %s438 = smul.addr %s437, 8
      %s439 = smul.addr %s438, 8
      %s440 = scalar_lea.vmem %s13, %s439
      %v442 = vld [vmem:[%s435] sm:$0xff]
      %v443 = vld [vmem:[%s435 + $0x8] sm:$0xff]
      %v444 = vld [vmem:[%s435 + $0x10] sm:$0xff]
      %v445 = vld [vmem:[%s435 + $0x18] sm:$0xff]
      %v446 = vld [vmem:[%s435 + $0x20] sm:$0xff]
      %v447 = vld [vmem:[%s435 + $0x28] sm:$0xff]
      %v448 = vld [vmem:[%s435 + $0x30] sm:$0xff]
      %v449 = vld [vmem:[%s435 + $0x38] sm:$0xff]
      %v450 = vld [vmem:[%s1] sm:$0xff]
      %v451 = vld [vmem:[%s1 + $0x8] sm:$0xff]
      %v452 = vld [vmem:[%s2] sm:$0x1]
      %v453 = vld [vmem:[%s3] sm:$0x1]
      %vm454 = vcmask 130048
      %v455 = vsel %vm454, %v442, 0.0
      %v456 = vsel %vm454, %v443, 0.0
      %v457 = vadd.f32 %v455, %v456
      %v458 = vsel %vm454, %v444, 0.0
      %v459 = vadd.f32 %v457, %v458
      %v460 = vsel %vm454, %v445, 0.0
      %v461 = vadd.f32 %v459, %v460
      %v462 = vsel %vm454, %v446, 0.0
      %v463 = vadd.f32 %v461, %v462
      %v464 = vsel %vm454, %v447, 0.0
      %v465 = vadd.f32 %v463, %v464
      %v466 = vsel %vm454, %v448, 0.0
      %v467 = vadd.f32 %v465, %v466
      %v468 = vsel %vm454, %v449, 0.0
      %v469 = vadd.f32 %v467, %v468
      %v470 = vrot.slane %v469, 4
      %v471 = vadd.f32 %v469, %v470
      %v472 = vrot.slane %v471, 2
      %v473 = vadd.f32 %v471, %v472
      %v474 = vrot.slane %v473, 1
      %v475 = vadd.f32 %v473, %v474
      %v477 = vsel %vm454, %v475, 0
      %479 = vmatpush.msra.mxu0 0.0
      %480 = vmatpush.msra.mxu0 0.0
      %481 = vmatpush.msra.mxu0 0.0
      %482 = vmatpush.msra.mxu0 0.0
      %483 = vmatpush.msra.mxu0 0.0
      %484 = vmatpush.msra.mxu0 0.0
      %485 = vmatpush.msra.mxu0 0.0
      %486 = vmatpush.msra.mxu0 0.0
      %487 = vmatpush.msra.mxu0 0.0
      %488 = vmatpush.msra.mxu0 0.0
      %489 = vmatpush.msra.mxu0 0.0
      %490 = vmatpush.msra.mxu0 0.0
      %491 = vmatpush.msra.mxu0 0.0
      %492 = vmatpush.msra.mxu0 0.0
      %493 = vmatpush.msra.mxu0 %v451
      %494 = vmatpush.msra.mxu0 %v450
      %495 = vmatmul.f32.gmra.mxu0 %v477
      %v496 = vpop.f32.mrf.mxu0
      %v497 = vadd.f32 0.0, %v496
      %498 = vdwg.mxu0
      %v499 = vperm.slane %v497, 0
      %v500 = vsub.f32 %v442, %v499
      %v501 = vsub.f32 %v443, %v499
      %v502 = vsub.f32 %v444, %v499
      %v503 = vsub.f32 %v445, %v499
      %v504 = vsub.f32 %v446, %v499
      %v505 = vsub.f32 %v447, %v499
      %v506 = vsub.f32 %v448, %v499
      %v507 = vsub.f32 %v449, %v499
      %v508 = vmul.f32 %v500, %v500
      %v509 = vmul.f32 %v501, %v501
      %v510 = vmul.f32 %v502, %v502
      %v511 = vmul.f32 %v503, %v503
      %v512 = vmul.f32 %v504, %v504
      %v513 = vmul.f32 %v505, %v505
      %v514 = vmul.f32 %v506, %v506
      %v515 = vmul.f32 %v507, %v507
      %v516 = vsel %vm454, %v508, 0.0
      %v517 = vsel %vm454, %v509, 0.0
      %v518 = vadd.f32 %v516, %v517
      %v519 = vsel %vm454, %v510, 0.0
      %v520 = vadd.f32 %v518, %v519
      %v521 = vsel %vm454, %v511, 0.0
      %v522 = vadd.f32 %v520, %v521
      %v523 = vsel %vm454, %v512, 0.0
      %v524 = vadd.f32 %v522, %v523
      %v525 = vsel %vm454, %v513, 0.0
      %v526 = vadd.f32 %v524, %v525
      %v527 = vsel %vm454, %v514, 0.0
      %v528 = vadd.f32 %v526, %v527
      %v529 = vsel %vm454, %v515, 0.0
      %v530 = vadd.f32 %v528, %v529
      %v531 = vrot.slane %v530, 4
      %v532 = vadd.f32 %v530, %v531
      %v533 = vrot.slane %v532, 2
      %v534 = vadd.f32 %v532, %v533
      %v535 = vrot.slane %v534, 1
      %v536 = vadd.f32 %v534, %v535
      %v538 = vsel %vm454, %v536, 0
      %540 = vmatpush.msra.mxu0 0.0
      %541 = vmatpush.msra.mxu0 0.0
      %542 = vmatpush.msra.mxu0 0.0
      %543 = vmatpush.msra.mxu0 0.0
      %544 = vmatpush.msra.mxu0 0.0
      %545 = vmatpush.msra.mxu0 0.0
      %546 = vmatpush.msra.mxu0 0.0
      %547 = vmatpush.msra.mxu0 0.0
      %548 = vmatpush.msra.mxu0 0.0
      %549 = vmatpush.msra.mxu0 0.0
      %550 = vmatpush.msra.mxu0 0.0
      %551 = vmatpush.msra.mxu0 0.0
      %552 = vmatpush.msra.mxu0 0.0
      %553 = vmatpush.msra.mxu0 0.0
      %554 = vmatpush.msra.mxu0 %v451
      %555 = vmatpush.msra.mxu0 %v450
      %556 = vmatmul.f32.gmra.mxu0 %v538
      %v557 = vpop.f32.mrf.mxu0
      %v558 = vadd.f32 1e-05, %v557
      %559 = vdwg.mxu0
      %v560 = vrsqrt.pop %v558
      %v561 = vmul.f32 %v560, %v558
      %v562 = vmul.f32 %v561, %v560
      %v563 = vmul.f32 0.5, %v562
      %v564 = vsub.f32 1.5, %v563
      %v565 = vmul.f32 %v560, %v564
      %vm566 = vweird.f32 %v558
      %vm567 = vweird.f32 %v560
      %vm568 = vmor %vm566, %vm567
      %v569 = vsel %vm568, %v560, %v565
      %v570 = vmul.f32 %v569, %v452
      %v571 = vperm.slane %v570, 0
      %v572 = vmul.f32 %v500, %v571
      %v573 = vmul.f32 %v501, %v571
      %v574 = vmul.f32 %v502, %v571
      %v575 = vmul.f32 %v503, %v571
      %v576 = vmul.f32 %v504, %v571
      %v577 = vmul.f32 %v505, %v571
      %v578 = vmul.f32 %v506, %v571
      %v579 = vmul.f32 %v507, %v571
      %v581 = vperm.slane %v453, 0
      %v583 = vadd.f32 %v572, %v581
      %v584 = vadd.f32 %v573, %v581
      %v585 = vadd.f32 %v574, %v581
      %v586 = vadd.f32 %v575, %v581
      %v587 = vadd.f32 %v576, %v581
      %v588 = vadd.f32 %v577, %v581
      %v589 = vadd.f32 %v578, %v581
      %v590 = vadd.f32 %v579, %v581
      %v591 = vxor.u32 %v583, 2147483648
      %v592 = vxor.u32 %v584, 2147483648
      %v593 = vxor.u32 %v585, 2147483648
      %v594 = vxor.u32 %v586, 2147483648
      %v595 = vxor.u32 %v587, 2147483648
      %v596 = vxor.u32 %v588, 2147483648
      %v597 = vxor.u32 %v589, 2147483648
      %v598 = vxor.u32 %v590, 2147483648
      %v599 = vmul.f32 %v591, 1.442695
      %v600 = vpow.pop %v599
      %v601 = vmul.f32 %v592, 1.442695
      %v602 = vpow.pop %v601
      %v603 = vmul.f32 %v593, 1.442695
      %v604 = vpow.pop %v603
      %v605 = vmul.f32 %v594, 1.442695
      %v606 = vpow.pop %v605
      %v607 = vmul.f32 %v595, 1.442695
      %v608 = vpow.pop %v607
      %v609 = vmul.f32 %v596, 1.442695
      %v610 = vpow.pop %v609
      %v611 = vmul.f32 %v597, 1.442695
      %v612 = vpow.pop %v611
      %v613 = vmul.f32 %v598, 1.442695
      %v614 = vpow.pop %v613
      %v615 = vadd.f32 %v600, 1.0
      %v616 = vadd.f32 %v602, 1.0
      %v617 = vadd.f32 %v604, 1.0
      %v618 = vadd.f32 %v606, 1.0
      %v619 = vadd.f32 %v608, 1.0
      %v620 = vadd.f32 %v610, 1.0
      %v621 = vadd.f32 %v612, 1.0
      %v622 = vadd.f32 %v614, 1.0
      %v623 = vrcp.pop %v615
      %v624 = vmul.f32 %v615, %v623
      %v625 = vsub.f32 1.0, %v624
      %v626 = vmul.f32 %v623, %v625
      %v627 = vadd.f32 %v623, %v626
      %vm628 = vweird.f32 %v615
      %vm629 = vweird.f32 %v623
      %vm630 = vmor %vm628, %vm629
      %v631 = vsel %vm630, %v623, %v627
      %v632 = vand.u32 2147483647, %v615
      %vm633 = vcmp.eq.f32.partialorder %v632, 8.507059e+37
      %v634 = vand.u32 %v615, 2147483648
      %v635 = vor.u32 1.1754944e-38, %v634
      %v636 = vsel %vm633, %v635, %v631
      %v637 = vmul.f32 1.0, %v636
      %v638 = vrcp.pop %v616
      %v639 = vmul.f32 %v616, %v638
      %v640 = vsub.f32 1.0, %v639
      %v641 = vmul.f32 %v638, %v640
      %v642 = vadd.f32 %v638, %v641
      %vm643 = vweird.f32 %v616
      %vm644 = vweird.f32 %v638
      %vm645 = vmor %vm643, %vm644
      %v646 = vsel %vm645, %v638, %v642
      %v647 = vand.u32 2147483647, %v616
      %vm648 = vcmp.eq.f32.partialorder %v647, 8.507059e+37
      %v649 = vand.u32 %v616, 2147483648
      %v650 = vor.u32 1.1754944e-38, %v649
      %v651 = vsel %vm648, %v650, %v646
      %v652 = vmul.f32 1.0, %v651
      %v653 = vrcp.pop %v617
      %v654 = vmul.f32 %v617, %v653
      %v655 = vsub.f32 1.0, %v654
      %v656 = vmul.f32 %v653, %v655
      %v657 = vadd.f32 %v653, %v656
      %vm658 = vweird.f32 %v617
      %vm659 = vweird.f32 %v653
      %vm660 = vmor %vm658, %vm659
      %v661 = vsel %vm660, %v653, %v657
      %v662 = vand.u32 2147483647, %v617
      %vm663 = vcmp.eq.f32.partialorder %v662, 8.507059e+37
      %v664 = vand.u32 %v617, 2147483648
      %v665 = vor.u32 1.1754944e-38, %v664
      %v666 = vsel %vm663, %v665, %v661
      %v667 = vmul.f32 1.0, %v666
      %v668 = vrcp.pop %v618
      %v669 = vmul.f32 %v618, %v668
      %v670 = vsub.f32 1.0, %v669
      %v671 = vmul.f32 %v668, %v670
      %v672 = vadd.f32 %v668, %v671
      %vm673 = vweird.f32 %v618
      %vm674 = vweird.f32 %v668
      %vm675 = vmor %vm673, %vm674
      %v676 = vsel %vm675, %v668, %v672
      %v677 = vand.u32 2147483647, %v618
      %vm678 = vcmp.eq.f32.partialorder %v677, 8.507059e+37
      %v679 = vand.u32 %v618, 2147483648
      %v680 = vor.u32 1.1754944e-38, %v679
      %v681 = vsel %vm678, %v680, %v676
      %v682 = vmul.f32 1.0, %v681
      %v683 = vrcp.pop %v619
      %v684 = vmul.f32 %v619, %v683
      %v685 = vsub.f32 1.0, %v684
      %v686 = vmul.f32 %v683, %v685
      %v687 = vadd.f32 %v683, %v686
      %vm688 = vweird.f32 %v619
      %vm689 = vweird.f32 %v683
      %vm690 = vmor %vm688, %vm689
      %v691 = vsel %vm690, %v683, %v687
      %v692 = vand.u32 2147483647, %v619
      %vm693 = vcmp.eq.f32.partialorder %v692, 8.507059e+37
      %v694 = vand.u32 %v619, 2147483648
      %v695 = vor.u32 1.1754944e-38, %v694
      %v696 = vsel %vm693, %v695, %v691
      %v697 = vmul.f32 1.0, %v696
      %v698 = vrcp.pop %v620
      %v699 = vmul.f32 %v620, %v698
      %v700 = vsub.f32 1.0, %v699
      %v701 = vmul.f32 %v698, %v700
      %v702 = vadd.f32 %v698, %v701
      %vm703 = vweird.f32 %v620
      %vm704 = vweird.f32 %v698
      %vm705 = vmor %vm703, %vm704
      %v706 = vsel %vm705, %v698, %v702
      %v707 = vand.u32 2147483647, %v620
      %vm708 = vcmp.eq.f32.partialorder %v707, 8.507059e+37
      %v709 = vand.u32 %v620, 2147483648
      %v710 = vor.u32 1.1754944e-38, %v709
      %v711 = vsel %vm708, %v710, %v706
      %v712 = vmul.f32 1.0, %v711
      %v713 = vrcp.pop %v621
      %v714 = vmul.f32 %v621, %v713
      %v715 = vsub.f32 1.0, %v714
      %v716 = vmul.f32 %v713, %v715
      %v717 = vadd.f32 %v713, %v716
      %vm718 = vweird.f32 %v621
      %vm719 = vweird.f32 %v713
      %vm720 = vmor %vm718, %vm719
      %v721 = vsel %vm720, %v713, %v717
      %v722 = vand.u32 2147483647, %v621
      %vm723 = vcmp.eq.f32.partialorder %v722, 8.507059e+37
      %v724 = vand.u32 %v621, 2147483648
      %v725 = vor.u32 1.1754944e-38, %v724
      %v726 = vsel %vm723, %v725, %v721
      %v727 = vmul.f32 1.0, %v726
      %v728 = vrcp.pop %v622
      %v729 = vmul.f32 %v622, %v728
      %v730 = vsub.f32 1.0, %v729
      %v731 = vmul.f32 %v728, %v730
      %v732 = vadd.f32 %v728, %v731
      %vm733 = vweird.f32 %v622
      %vm734 = vweird.f32 %v728
      %vm735 = vmor %vm733, %vm734
      %v736 = vsel %vm735, %v728, %v732
      %v737 = vand.u32 2147483647, %v622
      %vm738 = vcmp.eq.f32.partialorder %v737, 8.507059e+37
      %v739 = vand.u32 %v622, 2147483648
      %v740 = vor.u32 1.1754944e-38, %v739
      %v741 = vsel %vm738, %v740, %v736
      %v742 = vmul.f32 1.0, %v741
      %v743 = vmul.f32 %v583, %v637
      %v744 = vmul.f32 %v584, %v652
      %v745 = vmul.f32 %v585, %v667
      %v746 = vmul.f32 %v586, %v682
      %v747 = vmul.f32 %v587, %v697
      %v748 = vmul.f32 %v588, %v712
      %v749 = vmul.f32 %v589, %v727
      %v750 = vmul.f32 %v590, %v742
      %v751 = vld [vmem:[%s5] sm:$0x1]
      %v752 = vlaneseq
      %v753 = vshrl.u32 %v752, 7
      %v754 = vadd.s32 %v753, 8
      %v755 = vadd.s32 %v753, 16
      %v756 = vadd.s32 %v753, 24
      %v757 = vadd.s32 %v753, 32
      %v758 = vadd.s32 %v753, 40
      %v759 = vadd.s32 %v753, 48
      %v760 = vadd.s32 %v753, 56
      %v761 = vrot.slane %v743, 7
      %v762 = vrot.slane %v744, 7
      %v763 = vrot.slane %v745, 7
      %v764 = vrot.slane %v746, 7
      %v765 = vrot.slane %v747, 7
      %v766 = vrot.slane %v748, 7
      %v767 = vrot.slane %v749, 7
      %v768 = vrot.slane %v750, 7
      %vm769 = vcmp.lt.s32.totalorder %v753, 1
      %v770 = vsel %vm769, %v767, %v768
      %v771 = vsel %vm769, %v766, %v767
      %v772 = vsel %vm769, %v765, %v766
      %v773 = vsel %vm769, %v764, %v765
      %v774 = vsel %vm769, %v763, %v764
      %v775 = vsel %vm769, %v762, %v763
      %v776 = vsel %vm769, %v761, %v762
      %v777 = vsel %vm769, %v768, %v761
      %v778 = vadd.s32 %v753, 4294967295
      %v779 = vadd.s32 %v754, 4294967295
      %v780 = vadd.s32 %v755, 4294967295
      %v781 = vadd.s32 %v756, 4294967295
      %v782 = vadd.s32 %v757, 4294967295
      %v783 = vadd.s32 %v758, 4294967295
      %v784 = vadd.s32 %v759, 4294967295
      %v785 = vadd.s32 %v760, 4294967295
      %vm786 = vcmp.ge.s32.totalorder %v778, 0
      %vm787 = vcmp.ge.s32.totalorder %v779, 0
      %vm788 = vcmp.ge.s32.totalorder %v780, 0
      %vm789 = vcmp.ge.s32.totalorder %v781, 0
      %vm790 = vcmp.ge.s32.totalorder %v782, 0
      %vm791 = vcmp.ge.s32.totalorder %v783, 0
      %vm792 = vcmp.ge.s32.totalorder %v784, 0
      %vm793 = vcmp.ge.s32.totalorder %v785, 0
      %vm794 = vcmp.lt.s32.totalorder %v778, 64
      %vm795 = vcmp.lt.s32.totalorder %v779, 64
      %vm796 = vcmp.lt.s32.totalorder %v780, 64
      %vm797 = vcmp.lt.s32.totalorder %v781, 64
      %vm798 = vcmp.lt.s32.totalorder %v782, 64
      %vm799 = vcmp.lt.s32.totalorder %v783, 64
      %vm800 = vcmp.lt.s32.totalorder %v784, 64
      %vm801 = vcmp.lt.s32.totalorder %v785, 64
      %vm802 = vmand %vm786, %vm794
      %vm803 = vmand %vm787, %vm795
      %vm804 = vmand %vm788, %vm796
      %vm805 = vmand %vm789, %vm797
      %vm806 = vmand %vm790, %vm798
      %vm807 = vmand %vm791, %vm799
      %vm808 = vmand %vm792, %vm800
      %vm809 = vmand %vm793, %vm801
      %v810 = vsel %vm802, 1, 0
      %v811 = vsel %vm803, 1, 0
      %v812 = vsel %vm804, 1, 0
      %v813 = vsel %vm805, 1, 0
      %v814 = vsel %vm806, 1, 0
      %v815 = vsel %vm807, 1, 0
      %v816 = vsel %vm808, 1, 0
      %v817 = vsel %vm809, 1, 0
      %vm818 = vcmp.eq.s32.totalorder %v810, 1
      %vm819 = vcmp.eq.s32.totalorder %v811, 1
      %vm820 = vcmp.eq.s32.totalorder %v812, 1
      %vm821 = vcmp.eq.s32.totalorder %v813, 1
      %vm822 = vcmp.eq.s32.totalorder %v814, 1
      %vm823 = vcmp.eq.s32.totalorder %v815, 1
      %vm824 = vcmp.eq.s32.totalorder %v816, 1
      %vm825 = vcmp.eq.s32.totalorder %v817, 1
      %v826 = vsel %vm818, %v777, 0.0
      %v827 = vsel %vm819, %v776, 0.0
      %v828 = vsel %vm820, %v775, 0.0
      %v829 = vsel %vm821, %v774, 0.0
      %v830 = vsel %vm822, %v773, 0.0
      %v831 = vsel %vm823, %v772, 0.0
      %v832 = vsel %vm824, %v771, 0.0
      %v833 = vsel %vm825, %v770, 0.0
      %v834 = vpack.c.bf16 %v827, %v826
      %v835 = vpack.c.bf16 %v829, %v828
      %v836 = vpack.c.bf16 %v831, %v830
      %v837 = vpack.c.bf16 %v833, %v832
      %v838 = vld [vmem:[%s4] sm:$0xf]
      %v839 = vld [vmem:[%s4 + $0x4] sm:$0xf]
      %v840 = vpack.c.bf16 %v744, %v743
      %v841 = vpack.c.bf16 %v746, %v745
      %v842 = vpack.c.bf16 %v748, %v747
      %v843 = vpack.c.bf16 %v750, %v749
      %s844 = scalar_lea.vmem %s4, 8
      %v845 = vld [vmem:[%s844] sm:$0xf]
      %v846 = vld [vmem:[%s844 + $0x4] sm:$0xf]
      %v849 = vunpack.c.l.b16 %v845
      %v850 = vunpack.c.l.b16 %v846
      %v851 = vpack.c.b16 %v850, %v849
      %v854 = vsel %vm454, %v840, 0
      %v857 = vsel %vm454, %v841, 0
      %v860 = vsel %vm454, %v842, 0
      %v863 = vsel %vm454, %v843, 0
      %865 = vmatpush.bf16.msra.mxu0 0
      %866 = vmatpush.bf16.msra.mxu0 0
      %867 = vmatpush.bf16.msra.mxu0 0
      %868 = vmatpush.bf16.msra.mxu0 0
      %869 = vmatpush.bf16.msra.mxu0 0
      %870 = vmatpush.bf16.msra.mxu0 0
      %871 = vmatpush.bf16.msra.mxu0 0
      %872 = vmatpush.bf16.msra.mxu0 %v851
      %873 = vmatmul.bf16.gmra.mxu0 %v854
      %v874 = vpop.f32.mrf.mxu0
      %v875 = vadd.f32 0.0, %v874
      %v876 = vpop.f32.mrf.mxu0
      %v877 = vadd.f32 0.0, %v876
      %878 = vmatmul.bf16.gmra.mxu0 %v857
      %v879 = vpop.f32.mrf.mxu0
      %v880 = vadd.f32 0.0, %v879
      %v881 = vpop.f32.mrf.mxu0
      %v882 = vadd.f32 0.0, %v881
      %883 = vmatmul.bf16.gmra.mxu0 %v860
      %v884 = vpop.f32.mrf.mxu0
      %v885 = vadd.f32 0.0, %v884
      %v886 = vpop.f32.mrf.mxu0
      %v887 = vadd.f32 0.0, %v886
      %888 = vmatmul.bf16.gmra.mxu0 %v863
      %v889 = vpop.f32.mrf.mxu0
      %v890 = vadd.f32 0.0, %v889
      %v891 = vpop.f32.mrf.mxu0
      %v892 = vadd.f32 0.0, %v891
      %893 = vdwg.mxu0
      %v896 = vunpack.c.l.b16 %v838
      %v897 = vunpack.c.l.b16 %v839
      %v898 = vpack.c.b16 %v897, %v896
      %v901 = vsel %vm454, %v834, 0
      %v904 = vsel %vm454, %v835, 0
      %v907 = vsel %vm454, %v836, 0
      %v910 = vsel %vm454, %v837, 0
      %912 = vmatpush.bf16.msra.mxu0 0
      %913 = vmatpush.bf16.msra.mxu0 0
      %914 = vmatpush.bf16.msra.mxu0 0
      %915 = vmatpush.bf16.msra.mxu0 0
      %916 = vmatpush.bf16.msra.mxu0 0
      %917 = vmatpush.bf16.msra.mxu0 0
      %918 = vmatpush.bf16.msra.mxu0 0
      %919 = vmatpush.bf16.msra.mxu0 %v898
      %920 = vmatmul.bf16.gmra.mxu0 %v901
      %v921 = vpop.f32.mrf.mxu0
      %v922 = vadd.f32 %v875, %v921
      %v923 = vpop.f32.mrf.mxu0
      %v924 = vadd.f32 %v877, %v923
      %925 = vmatmul.bf16.gmra.mxu0 %v904
      %v926 = vpop.f32.mrf.mxu0
      %v927 = vadd.f32 %v880, %v926
      %v928 = vpop.f32.mrf.mxu0
      %v929 = vadd.f32 %v882, %v928
      %930 = vmatmul.bf16.gmra.mxu0 %v907
      %v931 = vpop.f32.mrf.mxu0
      %v932 = vadd.f32 %v885, %v931
      %v933 = vpop.f32.mrf.mxu0
      %v934 = vadd.f32 %v887, %v933
      %935 = vmatmul.bf16.gmra.mxu0 %v910
      %v936 = vpop.f32.mrf.mxu0
      %v937 = vadd.f32 %v890, %v936
      %v938 = vpop.f32.mrf.mxu0
      %v939 = vadd.f32 %v892, %v938
      %940 = vdwg.mxu0
      %v941 = vrot.slane %v743, 1
      %v942 = vrot.slane %v744, 1
      %v943 = vrot.slane %v745, 1
      %v944 = vrot.slane %v746, 1
      %v945 = vrot.slane %v747, 1
      %v946 = vrot.slane %v748, 1
      %v947 = vrot.slane %v749, 1
      %v948 = vrot.slane %v750, 1
      %vm949 = vcmp.lt.s32.totalorder %v753, 7
      %v950 = vsel %vm949, %v947, %v948
      %v951 = vsel %vm949, %v946, %v947
      %v952 = vsel %vm949, %v945, %v946
      %v953 = vsel %vm949, %v944, %v945
      %v954 = vsel %vm949, %v943, %v944
      %v955 = vsel %vm949, %v942, %v943
      %v956 = vsel %vm949, %v941, %v942
      %v957 = vsel %vm949, %v948, %v941
      %v958 = vadd.s32 %v753, 1
      %v959 = vadd.s32 %v754, 1
      %v960 = vadd.s32 %v755, 1
      %v961 = vadd.s32 %v756, 1
      %v962 = vadd.s32 %v757, 1
      %v963 = vadd.s32 %v758, 1
      %v964 = vadd.s32 %v759, 1
      %v965 = vadd.s32 %v760, 1
      %vm966 = vcmp.ge.s32.totalorder %v958, 0
      %vm967 = vcmp.ge.s32.totalorder %v959, 0
      %vm968 = vcmp.ge.s32.totalorder %v960, 0
      %vm969 = vcmp.ge.s32.totalorder %v961, 0
      %vm970 = vcmp.ge.s32.totalorder %v962, 0
      %vm971 = vcmp.ge.s32.totalorder %v963, 0
      %vm972 = vcmp.ge.s32.totalorder %v964, 0
      %vm973 = vcmp.ge.s32.totalorder %v965, 0
      %vm974 = vcmp.lt.s32.totalorder %v958, 64
      %vm975 = vcmp.lt.s32.totalorder %v959, 64
      %vm976 = vcmp.lt.s32.totalorder %v960, 64
      %vm977 = vcmp.lt.s32.totalorder %v961, 64
      %vm978 = vcmp.lt.s32.totalorder %v962, 64
      %vm979 = vcmp.lt.s32.totalorder %v963, 64
      %vm980 = vcmp.lt.s32.totalorder %v964, 64
      %vm981 = vcmp.lt.s32.totalorder %v965, 64
      %vm982 = vmand %vm966, %vm974
      %vm983 = vmand %vm967, %vm975
      %vm984 = vmand %vm968, %vm976
      %vm985 = vmand %vm969, %vm977
      %vm986 = vmand %vm970, %vm978
      %vm987 = vmand %vm971, %vm979
      %vm988 = vmand %vm972, %vm980
      %vm989 = vmand %vm973, %vm981
      %v990 = vsel %vm982, 1, 0
      %v991 = vsel %vm983, 1, 0
      %v992 = vsel %vm984, 1, 0
      %v993 = vsel %vm985, 1, 0
      %v994 = vsel %vm986, 1, 0
      %v995 = vsel %vm987, 1, 0
      %v996 = vsel %vm988, 1, 0
      %v997 = vsel %vm989, 1, 0
      %vm998 = vcmp.eq.s32.totalorder %v990, 1
      %vm999 = vcmp.eq.s32.totalorder %v991, 1
      %vm1000 = vcmp.eq.s32.totalorder %v992, 1
      %vm1001 = vcmp.eq.s32.totalorder %v993, 1
      %vm1002 = vcmp.eq.s32.totalorder %v994, 1
      %vm1003 = vcmp.eq.s32.totalorder %v995, 1
      %vm1004 = vcmp.eq.s32.totalorder %v996, 1
      %vm1005 = vcmp.eq.s32.totalorder %v997, 1
      %v1006 = vsel %vm998, %v956, 0.0
      %v1007 = vsel %vm999, %v955, 0.0
      %v1008 = vsel %vm1000, %v954, 0.0
      %v1009 = vsel %vm1001, %v953, 0.0
      %v1010 = vsel %vm1002, %v952, 0.0
      %v1011 = vsel %vm1003, %v951, 0.0
      %v1012 = vsel %vm1004, %v950, 0.0
      %v1013 = vsel %vm1005, %v957, 0.0
      %v1014 = vpack.c.bf16 %v1007, %v1006
      %v1015 = vpack.c.bf16 %v1009, %v1008
      %v1016 = vpack.c.bf16 %v1011, %v1010
      %v1017 = vpack.c.bf16 %v1013, %v1012
      %s1018 = scalar_lea.vmem %s4, 16
      %v1019 = vld [vmem:[%s1018] sm:$0xf]
      %v1020 = vld [vmem:[%s1018 + $0x4] sm:$0xf]
      %v1023 = vunpack.c.l.b16 %v1019
      %v1024 = vunpack.c.l.b16 %v1020
      %v1025 = vpack.c.b16 %v1024, %v1023
      %v1028 = vsel %vm454, %v1014, 0
      %v1031 = vsel %vm454, %v1015, 0
      %v1034 = vsel %vm454, %v1016, 0
      %v1037 = vsel %vm454, %v1017, 0
      %1039 = vmatpush.bf16.msra.mxu0 0
      %1040 = vmatpush.bf16.msra.mxu0 0
      %1041 = vmatpush.bf16.msra.mxu0 0
      %1042 = vmatpush.bf16.msra.mxu0 0
      %1043 = vmatpush.bf16.msra.mxu0 0
      %1044 = vmatpush.bf16.msra.mxu0 0
      %1045 = vmatpush.bf16.msra.mxu0 0
      %1046 = vmatpush.bf16.msra.mxu0 %v1025
      %1047 = vmatmul.bf16.gmra.mxu0 %v1028
      %v1048 = vpop.f32.mrf.mxu0
      %v1049 = vadd.f32 0.0, %v1048
      %v1050 = vpop.f32.mrf.mxu0
      %v1051 = vadd.f32 0.0, %v1050
      %1052 = vmatmul.bf16.gmra.mxu0 %v1031
      %v1053 = vpop.f32.mrf.mxu0
      %v1054 = vadd.f32 0.0, %v1053
      %v1055 = vpop.f32.mrf.mxu0
      %v1056 = vadd.f32 0.0, %v1055
      %1057 = vmatmul.bf16.gmra.mxu0 %v1034
      %v1058 = vpop.f32.mrf.mxu0
      %v1059 = vadd.f32 0.0, %v1058
      %v1060 = vpop.f32.mrf.mxu0
      %v1061 = vadd.f32 0.0, %v1060
      %1062 = vmatmul.bf16.gmra.mxu0 %v1037
      %v1063 = vpop.f32.mrf.mxu0
      %v1064 = vadd.f32 0.0, %v1063
      %v1065 = vpop.f32.mrf.mxu0
      %v1066 = vadd.f32 0.0, %v1065
      %1067 = vdwg.mxu0
      %v1068 = vadd.f32 %v922, %v1049
      %v1069 = vadd.f32 %v924, %v1051
      %v1070 = vadd.f32 %v927, %v1054
      %v1071 = vadd.f32 %v929, %v1056
      %v1072 = vadd.f32 %v932, %v1059
      %v1073 = vadd.f32 %v934, %v1061
      %v1074 = vadd.f32 %v937, %v1064
      %v1075 = vadd.f32 %v939, %v1066
      %v1077 = vperm.slane %v751, 0
      %v1079 = vadd.f32 %v1068, %v1077
      %v1080 = vadd.f32 %v1069, %v1077
      %v1081 = vadd.f32 %v1070, %v1077
      %v1082 = vadd.f32 %v1071, %v1077
      %v1083 = vadd.f32 %v1072, %v1077
      %v1084 = vadd.f32 %v1073, %v1077
      %v1085 = vadd.f32 %v1074, %v1077
      %v1086 = vadd.f32 %v1075, %v1077
      %v1087 = vld [vmem:[%s6] sm:$0xff]
      %v1088 = vld [vmem:[%s6 + $0x8] sm:$0xff]
      %v1089 = vld [vmem:[%s6 + $0x10] sm:$0xff]
      %v1090 = vld [vmem:[%s6 + $0x18] sm:$0xff]
      %v1091 = vld [vmem:[%s7] sm:$0x1]
      %v1092 = vld [vmem:[%s8] sm:$0x1]
      %vm1093 = vcmask 261120
      %v1094 = vsel %vm1093, %v1079, 0.0
      %v1095 = vsel %vm1093, %v1080, 0.0
      %v1096 = vadd.f32 %v1094, %v1095
      %v1097 = vsel %vm1093, %v1081, 0.0
      %v1098 = vadd.f32 %v1096, %v1097
      %v1099 = vsel %vm1093, %v1082, 0.0
      %v1100 = vadd.f32 %v1098, %v1099
      %v1101 = vsel %vm1093, %v1083, 0.0
      %v1102 = vadd.f32 %v1100, %v1101
      %v1103 = vsel %vm1093, %v1084, 0.0
      %v1104 = vadd.f32 %v1102, %v1103
      %v1105 = vsel %vm1093, %v1085, 0.0
      %v1106 = vadd.f32 %v1104, %v1105
      %v1107 = vsel %vm1093, %v1086, 0.0
      %v1108 = vadd.f32 %v1106, %v1107
      %v1109 = vrot.slane %v1108, 4
      %v1110 = vadd.f32 %v1108, %v1109
      %v1111 = vrot.slane %v1110, 2
      %v1112 = vadd.f32 %v1110, %v1111
      %v1113 = vrot.slane %v1112, 1
      %v1114 = vadd.f32 %v1112, %v1113
      %v1116 = vsel %vm1093, %v1114, 0
      %1118 = vmatpush.msra.mxu0 0.0
      %1119 = vmatpush.msra.mxu0 0.0
      %1120 = vmatpush.msra.mxu0 0.0
      %1121 = vmatpush.msra.mxu0 0.0
      %1122 = vmatpush.msra.mxu0 0.0
      %1123 = vmatpush.msra.mxu0 0.0
      %1124 = vmatpush.msra.mxu0 0.0
      %1125 = vmatpush.msra.mxu0 0.0
      %1126 = vmatpush.msra.mxu0 0.0
      %1127 = vmatpush.msra.mxu0 0.0
      %1128 = vmatpush.msra.mxu0 0.0
      %1129 = vmatpush.msra.mxu0 0.0
      %1130 = vmatpush.msra.mxu0 %v1090
      %1131 = vmatpush.msra.mxu0 %v1089
      %1132 = vmatpush.msra.mxu0 %v1088
      %1133 = vmatpush.msra.mxu0 %v1087
      %1134 = vmatmul.f32.gmra.mxu0 %v1116
      %v1135 = vpop.f32.mrf.mxu0
      %v1136 = vadd.f32 0.0, %v1135
      %1137 = vdwg.mxu0
      %v1138 = vperm.slane %v1136, 0
      %v1139 = vsub.f32 %v1079, %v1138
      %v1140 = vsub.f32 %v1080, %v1138
      %v1141 = vsub.f32 %v1081, %v1138
      %v1142 = vsub.f32 %v1082, %v1138
      %v1143 = vsub.f32 %v1083, %v1138
      %v1144 = vsub.f32 %v1084, %v1138
      %v1145 = vsub.f32 %v1085, %v1138
      %v1146 = vsub.f32 %v1086, %v1138
      %v1147 = vmul.f32 %v1139, %v1139
      %v1148 = vmul.f32 %v1140, %v1140
      %v1149 = vmul.f32 %v1141, %v1141
      %v1150 = vmul.f32 %v1142, %v1142
      %v1151 = vmul.f32 %v1143, %v1143
      %v1152 = vmul.f32 %v1144, %v1144
      %v1153 = vmul.f32 %v1145, %v1145
      %v1154 = vmul.f32 %v1146, %v1146
      %v1155 = vsel %vm1093, %v1147, 0.0
      %v1156 = vsel %vm1093, %v1148, 0.0
      %v1157 = vadd.f32 %v1155, %v1156
      %v1158 = vsel %vm1093, %v1149, 0.0
      %v1159 = vadd.f32 %v1157, %v1158
      %v1160 = vsel %vm1093, %v1150, 0.0
      %v1161 = vadd.f32 %v1159, %v1160
      %v1162 = vsel %vm1093, %v1151, 0.0
      %v1163 = vadd.f32 %v1161, %v1162
      %v1164 = vsel %vm1093, %v1152, 0.0
      %v1165 = vadd.f32 %v1163, %v1164
      %v1166 = vsel %vm1093, %v1153, 0.0
      %v1167 = vadd.f32 %v1165, %v1166
      %v1168 = vsel %vm1093, %v1154, 0.0
      %v1169 = vadd.f32 %v1167, %v1168
      %v1170 = vrot.slane %v1169, 4
      %v1171 = vadd.f32 %v1169, %v1170
      %v1172 = vrot.slane %v1171, 2
      %v1173 = vadd.f32 %v1171, %v1172
      %v1174 = vrot.slane %v1173, 1
      %v1175 = vadd.f32 %v1173, %v1174
      %v1177 = vsel %vm1093, %v1175, 0
      %1179 = vmatpush.msra.mxu0 0.0
      %1180 = vmatpush.msra.mxu0 0.0
      %1181 = vmatpush.msra.mxu0 0.0
      %1182 = vmatpush.msra.mxu0 0.0
      %1183 = vmatpush.msra.mxu0 0.0
      %1184 = vmatpush.msra.mxu0 0.0
      %1185 = vmatpush.msra.mxu0 0.0
      %1186 = vmatpush.msra.mxu0 0.0
      %1187 = vmatpush.msra.mxu0 0.0
      %1188 = vmatpush.msra.mxu0 0.0
      %1189 = vmatpush.msra.mxu0 0.0
      %1190 = vmatpush.msra.mxu0 0.0
      %1191 = vmatpush.msra.mxu0 %v1090
      %1192 = vmatpush.msra.mxu0 %v1089
      %1193 = vmatpush.msra.mxu0 %v1088
      %1194 = vmatpush.msra.mxu0 %v1087
      %1195 = vmatmul.f32.gmra.mxu0 %v1177
      %v1196 = vpop.f32.mrf.mxu0
      %v1197 = vadd.f32 1e-05, %v1196
      %1198 = vdwg.mxu0
      %v1199 = vrsqrt.pop %v1197
      %v1200 = vmul.f32 %v1199, %v1197
      %v1201 = vmul.f32 %v1200, %v1199
      %v1202 = vmul.f32 0.5, %v1201
      %v1203 = vsub.f32 1.5, %v1202
      %v1204 = vmul.f32 %v1199, %v1203
      %vm1205 = vweird.f32 %v1197
      %vm1206 = vweird.f32 %v1199
      %vm1207 = vmor %vm1205, %vm1206
      %v1208 = vsel %vm1207, %v1199, %v1204
      %v1209 = vmul.f32 %v1208, %v1091
      %v1210 = vperm.slane %v1209, 0
      %v1211 = vmul.f32 %v1139, %v1210
      %v1212 = vmul.f32 %v1140, %v1210
      %v1213 = vmul.f32 %v1141, %v1210
      %v1214 = vmul.f32 %v1142, %v1210
      %v1215 = vmul.f32 %v1143, %v1210
      %v1216 = vmul.f32 %v1144, %v1210
      %v1217 = vmul.f32 %v1145, %v1210
      %v1218 = vmul.f32 %v1146, %v1210
      %v1220 = vperm.slane %v1092, 0
      %v1222 = vadd.f32 %v1211, %v1220
      %v1223 = vadd.f32 %v1212, %v1220
      %v1224 = vadd.f32 %v1213, %v1220
      %v1225 = vadd.f32 %v1214, %v1220
      %v1226 = vadd.f32 %v1215, %v1220
      %v1227 = vadd.f32 %v1216, %v1220
      %v1228 = vadd.f32 %v1217, %v1220
      %v1229 = vadd.f32 %v1218, %v1220
      %v1230 = vxor.u32 %v1222, 2147483648
      %v1231 = vxor.u32 %v1223, 2147483648
      %v1232 = vxor.u32 %v1224, 2147483648
      %v1233 = vxor.u32 %v1225, 2147483648
      %v1234 = vxor.u32 %v1226, 2147483648
      %v1235 = vxor.u32 %v1227, 2147483648
      %v1236 = vxor.u32 %v1228, 2147483648
      %v1237 = vxor.u32 %v1229, 2147483648
      %v1238 = vmul.f32 %v1230, 1.442695
      %v1239 = vpow.pop %v1238
      %v1240 = vmul.f32 %v1231, 1.442695
      %v1241 = vpow.pop %v1240
      %v1242 = vmul.f32 %v1232, 1.442695
      %v1243 = vpow.pop %v1242
      %v1244 = vmul.f32 %v1233, 1.442695
      %v1245 = vpow.pop %v1244
      %v1246 = vmul.f32 %v1234, 1.442695
      %v1247 = vpow.pop %v1246
      %v1248 = vmul.f32 %v1235, 1.442695
      %v1249 = vpow.pop %v1248
      %v1250 = vmul.f32 %v1236, 1.442695
      %v1251 = vpow.pop %v1250
      %v1252 = vmul.f32 %v1237, 1.442695
      %v1253 = vpow.pop %v1252
      %v1254 = vadd.f32 %v1239, 1.0
      %v1255 = vadd.f32 %v1241, 1.0
      %v1256 = vadd.f32 %v1243, 1.0
      %v1257 = vadd.f32 %v1245, 1.0
      %v1258 = vadd.f32 %v1247, 1.0
      %v1259 = vadd.f32 %v1249, 1.0
      %v1260 = vadd.f32 %v1251, 1.0
      %v1261 = vadd.f32 %v1253, 1.0
      %v1262 = vrcp.pop %v1254
      %v1263 = vmul.f32 %v1254, %v1262
      %v1264 = vsub.f32 1.0, %v1263
      %v1265 = vmul.f32 %v1262, %v1264
      %v1266 = vadd.f32 %v1262, %v1265
      %vm1267 = vweird.f32 %v1254
      %vm1268 = vweird.f32 %v1262
      %vm1269 = vmor %vm1267, %vm1268
      %v1270 = vsel %vm1269, %v1262, %v1266
      %v1271 = vand.u32 2147483647, %v1254
      %vm1272 = vcmp.eq.f32.partialorder %v1271, 8.507059e+37
      %v1273 = vand.u32 %v1254, 2147483648
      %v1274 = vor.u32 1.1754944e-38, %v1273
      %v1275 = vsel %vm1272, %v1274, %v1270
      %v1276 = vmul.f32 1.0, %v1275
      %v1277 = vrcp.pop %v1255
      %v1278 = vmul.f32 %v1255, %v1277
      %v1279 = vsub.f32 1.0, %v1278
      %v1280 = vmul.f32 %v1277, %v1279
      %v1281 = vadd.f32 %v1277, %v1280
      %vm1282 = vweird.f32 %v1255
      %vm1283 = vweird.f32 %v1277
      %vm1284 = vmor %vm1282, %vm1283
      %v1285 = vsel %vm1284, %v1277, %v1281
      %v1286 = vand.u32 2147483647, %v1255
      %vm1287 = vcmp.eq.f32.partialorder %v1286, 8.507059e+37
      %v1288 = vand.u32 %v1255, 2147483648
      %v1289 = vor.u32 1.1754944e-38, %v1288
      %v1290 = vsel %vm1287, %v1289, %v1285
      %v1291 = vmul.f32 1.0, %v1290
      %v1292 = vrcp.pop %v1256
      %v1293 = vmul.f32 %v1256, %v1292
      %v1294 = vsub.f32 1.0, %v1293
      %v1295 = vmul.f32 %v1292, %v1294
      %v1296 = vadd.f32 %v1292, %v1295
      %vm1297 = vweird.f32 %v1256
      %vm1298 = vweird.f32 %v1292
      %vm1299 = vmor %vm1297, %vm1298
      %v1300 = vsel %vm1299, %v1292, %v1296
      %v1301 = vand.u32 2147483647, %v1256
      %vm1302 = vcmp.eq.f32.partialorder %v1301, 8.507059e+37
      %v1303 = vand.u32 %v1256, 2147483648
      %v1304 = vor.u32 1.1754944e-38, %v1303
      %v1305 = vsel %vm1302, %v1304, %v1300
      %v1306 = vmul.f32 1.0, %v1305
      %v1307 = vrcp.pop %v1257
      %v1308 = vmul.f32 %v1257, %v1307
      %v1309 = vsub.f32 1.0, %v1308
      %v1310 = vmul.f32 %v1307, %v1309
      %v1311 = vadd.f32 %v1307, %v1310
      %vm1312 = vweird.f32 %v1257
      %vm1313 = vweird.f32 %v1307
      %vm1314 = vmor %vm1312, %vm1313
      %v1315 = vsel %vm1314, %v1307, %v1311
      %v1316 = vand.u32 2147483647, %v1257
      %vm1317 = vcmp.eq.f32.partialorder %v1316, 8.507059e+37
      %v1318 = vand.u32 %v1257, 2147483648
      %v1319 = vor.u32 1.1754944e-38, %v1318
      %v1320 = vsel %vm1317, %v1319, %v1315
      %v1321 = vmul.f32 1.0, %v1320
      %v1322 = vrcp.pop %v1258
      %v1323 = vmul.f32 %v1258, %v1322
      %v1324 = vsub.f32 1.0, %v1323
      %v1325 = vmul.f32 %v1322, %v1324
      %v1326 = vadd.f32 %v1322, %v1325
      %vm1327 = vweird.f32 %v1258
      %vm1328 = vweird.f32 %v1322
      %vm1329 = vmor %vm1327, %vm1328
      %v1330 = vsel %vm1329, %v1322, %v1326
      %v1331 = vand.u32 2147483647, %v1258
      %vm1332 = vcmp.eq.f32.partialorder %v1331, 8.507059e+37
      %v1333 = vand.u32 %v1258, 2147483648
      %v1334 = vor.u32 1.1754944e-38, %v1333
      %v1335 = vsel %vm1332, %v1334, %v1330
      %v1336 = vmul.f32 1.0, %v1335
      %v1337 = vrcp.pop %v1259
      %v1338 = vmul.f32 %v1259, %v1337
      %v1339 = vsub.f32 1.0, %v1338
      %v1340 = vmul.f32 %v1337, %v1339
      %v1341 = vadd.f32 %v1337, %v1340
      %vm1342 = vweird.f32 %v1259
      %vm1343 = vweird.f32 %v1337
      %vm1344 = vmor %vm1342, %vm1343
      %v1345 = vsel %vm1344, %v1337, %v1341
      %v1346 = vand.u32 2147483647, %v1259
      %vm1347 = vcmp.eq.f32.partialorder %v1346, 8.507059e+37
      %v1348 = vand.u32 %v1259, 2147483648
      %v1349 = vor.u32 1.1754944e-38, %v1348
      %v1350 = vsel %vm1347, %v1349, %v1345
      %v1351 = vmul.f32 1.0, %v1350
      %v1352 = vrcp.pop %v1260
      %v1353 = vmul.f32 %v1260, %v1352
      %v1354 = vsub.f32 1.0, %v1353
      %v1355 = vmul.f32 %v1352, %v1354
      %v1356 = vadd.f32 %v1352, %v1355
      %vm1357 = vweird.f32 %v1260
      %vm1358 = vweird.f32 %v1352
      %vm1359 = vmor %vm1357, %vm1358
      %v1360 = vsel %vm1359, %v1352, %v1356
      %v1361 = vand.u32 2147483647, %v1260
      %vm1362 = vcmp.eq.f32.partialorder %v1361, 8.507059e+37
      %v1363 = vand.u32 %v1260, 2147483648
      %v1364 = vor.u32 1.1754944e-38, %v1363
      %v1365 = vsel %vm1362, %v1364, %v1360
      %v1366 = vmul.f32 1.0, %v1365
      %v1367 = vrcp.pop %v1261
      %v1368 = vmul.f32 %v1261, %v1367
      %v1369 = vsub.f32 1.0, %v1368
      %v1370 = vmul.f32 %v1367, %v1369
      %v1371 = vadd.f32 %v1367, %v1370
      %vm1372 = vweird.f32 %v1261
      %vm1373 = vweird.f32 %v1367
      %vm1374 = vmor %vm1372, %vm1373
      %v1375 = vsel %vm1374, %v1367, %v1371
      %v1376 = vand.u32 2147483647, %v1261
      %vm1377 = vcmp.eq.f32.partialorder %v1376, 8.507059e+37
      %v1378 = vand.u32 %v1261, 2147483648
      %v1379 = vor.u32 1.1754944e-38, %v1378
      %v1380 = vsel %vm1377, %v1379, %v1375
      %v1381 = vmul.f32 1.0, %v1380
      %v1382 = vmul.f32 %v1222, %v1276
      %v1383 = vmul.f32 %v1223, %v1291
      %v1384 = vmul.f32 %v1224, %v1306
      %v1385 = vmul.f32 %v1225, %v1321
      %v1386 = vmul.f32 %v1226, %v1336
      %v1387 = vmul.f32 %v1227, %v1351
      %v1388 = vmul.f32 %v1228, %v1366
      %v1389 = vmul.f32 %v1229, %v1381
      %v1390 = vld [vmem:[%s10] sm:$0x1]
      %v1391 = vrot.slane %v1382, 7
      %v1392 = vrot.slane %v1383, 7
      %v1393 = vrot.slane %v1384, 7
      %v1394 = vrot.slane %v1385, 7
      %v1395 = vrot.slane %v1386, 7
      %v1396 = vrot.slane %v1387, 7
      %v1397 = vrot.slane %v1388, 7
      %v1398 = vrot.slane %v1389, 7
      %v1399 = vsel %vm769, %v1397, %v1398
      %v1400 = vsel %vm769, %v1396, %v1397
      %v1401 = vsel %vm769, %v1395, %v1396
      %v1402 = vsel %vm769, %v1394, %v1395
      %v1403 = vsel %vm769, %v1393, %v1394
      %v1404 = vsel %vm769, %v1392, %v1393
      %v1405 = vsel %vm769, %v1391, %v1392
      %v1406 = vsel %vm769, %v1398, %v1391
      %v1407 = vsel %vm818, %v1406, 0.0
      %v1408 = vsel %vm819, %v1405, 0.0
      %v1409 = vsel %vm820, %v1404, 0.0
      %v1410 = vsel %vm821, %v1403, 0.0
      %v1411 = vsel %vm822, %v1402, 0.0
      %v1412 = vsel %vm823, %v1401, 0.0
      %v1413 = vsel %vm824, %v1400, 0.0
      %v1414 = vsel %vm825, %v1399, 0.0
      %v1415 = vpack.c.bf16 %v1408, %v1407
      %v1416 = vpack.c.bf16 %v1410, %v1409
      %v1417 = vpack.c.bf16 %v1412, %v1411
      %v1418 = vpack.c.bf16 %v1414, %v1413
      %v1419 = vld [vmem:[%s9] sm:$0xf]
      %v1420 = vld [vmem:[%s9 + $0x4] sm:$0xf]
      %v1421 = vld [vmem:[%s9 + $0x8] sm:$0xf]
      %v1422 = vld [vmem:[%s9 + $0xc] sm:$0xf]
      %v1423 = vpack.c.bf16 %v1383, %v1382
      %v1424 = vpack.c.bf16 %v1385, %v1384
      %v1425 = vpack.c.bf16 %v1387, %v1386
      %v1426 = vpack.c.bf16 %v1389, %v1388
      %s1427 = scalar_lea.vmem %s9, 16
      %v1428 = vld [vmem:[%s1427] sm:$0xf]
      %v1429 = vld [vmem:[%s1427 + $0x4] sm:$0xf]
      %v1430 = vld [vmem:[%s1427 + $0x8] sm:$0xf]
      %v1431 = vld [vmem:[%s1427 + $0xc] sm:$0xf]
      %v1436 = vunpack.c.l.b16 %v1428
      %v1437 = vunpack.c.l.b16 %v1429
      %v1438 = vunpack.c.l.b16 %v1430
      %v1439 = vunpack.c.l.b16 %v1431
      %v1440 = vpack.c.b16 %v1437, %v1436
      %v1441 = vpack.c.b16 %v1439, %v1438
      %v1445 = vsel %vm1093, %v1423, 0
      %v1448 = vsel %vm1093, %v1424, 0
      %v1451 = vsel %vm1093, %v1425, 0
      %v1454 = vsel %vm1093, %v1426, 0
      %1456 = vmatpush.bf16.msra.mxu0 0
      %1457 = vmatpush.bf16.msra.mxu0 0
      %1458 = vmatpush.bf16.msra.mxu0 0
      %1459 = vmatpush.bf16.msra.mxu0 0
      %1460 = vmatpush.bf16.msra.mxu0 0
      %1461 = vmatpush.bf16.msra.mxu0 0
      %1462 = vmatpush.bf16.msra.mxu0 %v1441
      %1463 = vmatpush.bf16.msra.mxu0 %v1440
      %1464 = vmatmul.bf16.gmra.mxu0 %v1445
      %v1465 = vpop.f32.mrf.mxu0
      %v1466 = vadd.f32 0.0, %v1465
      %v1467 = vpop.f32.mrf.mxu0
      %v1468 = vadd.f32 0.0, %v1467
      %1469 = vmatmul.bf16.gmra.mxu0 %v1448
      %v1470 = vpop.f32.mrf.mxu0
      %v1471 = vadd.f32 0.0, %v1470
      %v1472 = vpop.f32.mrf.mxu0
      %v1473 = vadd.f32 0.0, %v1472
      %1474 = vmatmul.bf16.gmra.mxu0 %v1451
      %v1475 = vpop.f32.mrf.mxu0
      %v1476 = vadd.f32 0.0, %v1475
      %v1477 = vpop.f32.mrf.mxu0
      %v1478 = vadd.f32 0.0, %v1477
      %1479 = vmatmul.bf16.gmra.mxu0 %v1454
      %v1480 = vpop.f32.mrf.mxu0
      %v1481 = vadd.f32 0.0, %v1480
      %v1482 = vpop.f32.mrf.mxu0
      %v1483 = vadd.f32 0.0, %v1482
      %1484 = vdwg.mxu0
      %v1489 = vunpack.c.l.b16 %v1419
      %v1490 = vunpack.c.l.b16 %v1420
      %v1491 = vunpack.c.l.b16 %v1421
      %v1492 = vunpack.c.l.b16 %v1422
      %v1493 = vpack.c.b16 %v1490, %v1489
      %v1494 = vpack.c.b16 %v1492, %v1491
      %v1498 = vsel %vm1093, %v1415, 0
      %v1501 = vsel %vm1093, %v1416, 0
      %v1504 = vsel %vm1093, %v1417, 0
      %v1507 = vsel %vm1093, %v1418, 0
      %1509 = vmatpush.bf16.msra.mxu0 0
      %1510 = vmatpush.bf16.msra.mxu0 0
      %1511 = vmatpush.bf16.msra.mxu0 0
      %1512 = vmatpush.bf16.msra.mxu0 0
      %1513 = vmatpush.bf16.msra.mxu0 0
      %1514 = vmatpush.bf16.msra.mxu0 0
      %1515 = vmatpush.bf16.msra.mxu0 %v1494
      %1516 = vmatpush.bf16.msra.mxu0 %v1493
      %1517 = vmatmul.bf16.gmra.mxu0 %v1498
      %v1518 = vpop.f32.mrf.mxu0
      %v1519 = vadd.f32 %v1466, %v1518
      %v1520 = vpop.f32.mrf.mxu0
      %v1521 = vadd.f32 %v1468, %v1520
      %1522 = vmatmul.bf16.gmra.mxu0 %v1501
      %v1523 = vpop.f32.mrf.mxu0
      %v1524 = vadd.f32 %v1471, %v1523
      %v1525 = vpop.f32.mrf.mxu0
      %v1526 = vadd.f32 %v1473, %v1525
      %1527 = vmatmul.bf16.gmra.mxu0 %v1504
      %v1528 = vpop.f32.mrf.mxu0
      %v1529 = vadd.f32 %v1476, %v1528
      %v1530 = vpop.f32.mrf.mxu0
      %v1531 = vadd.f32 %v1478, %v1530
      %1532 = vmatmul.bf16.gmra.mxu0 %v1507
      %v1533 = vpop.f32.mrf.mxu0
      %v1534 = vadd.f32 %v1481, %v1533
      %v1535 = vpop.f32.mrf.mxu0
      %v1536 = vadd.f32 %v1483, %v1535
      %1537 = vdwg.mxu0
      %v1538 = vrot.slane %v1382, 1
      %v1539 = vrot.slane %v1383, 1
      %v1540 = vrot.slane %v1384, 1
      %v1541 = vrot.slane %v1385, 1
      %v1542 = vrot.slane %v1386, 1
      %v1543 = vrot.slane %v1387, 1
      %v1544 = vrot.slane %v1388, 1
      %v1545 = vrot.slane %v1389, 1
      %v1546 = vsel %vm949, %v1544, %v1545
      %v1547 = vsel %vm949, %v1543, %v1544
      %v1548 = vsel %vm949, %v1542, %v1543
      %v1549 = vsel %vm949, %v1541, %v1542
      %v1550 = vsel %vm949, %v1540, %v1541
      %v1551 = vsel %vm949, %v1539, %v1540
      %v1552 = vsel %vm949, %v1538, %v1539
      %v1553 = vsel %vm949, %v1545, %v1538
      %v1554 = vsel %vm998, %v1552, 0.0
      %v1555 = vsel %vm999, %v1551, 0.0
      %v1556 = vsel %vm1000, %v1550, 0.0
      %v1557 = vsel %vm1001, %v1549, 0.0
      %v1558 = vsel %vm1002, %v1548, 0.0
      %v1559 = vsel %vm1003, %v1547, 0.0
      %v1560 = vsel %vm1004, %v1546, 0.0
      %v1561 = vsel %vm1005, %v1553, 0.0
      %v1562 = vpack.c.bf16 %v1555, %v1554
      %v1563 = vpack.c.bf16 %v1557, %v1556
      %v1564 = vpack.c.bf16 %v1559, %v1558
      %v1565 = vpack.c.bf16 %v1561, %v1560
      %s1566 = scalar_lea.vmem %s9, 32
      %v1567 = vld [vmem:[%s1566] sm:$0xf]
      %v1568 = vld [vmem:[%s1566 + $0x4] sm:$0xf]
      %v1569 = vld [vmem:[%s1566 + $0x8] sm:$0xf]
      %v1570 = vld [vmem:[%s1566 + $0xc] sm:$0xf]
      %v1575 = vunpack.c.l.b16 %v1567
      %v1576 = vunpack.c.l.b16 %v1568
      %v1577 = vunpack.c.l.b16 %v1569
      %v1578 = vunpack.c.l.b16 %v1570
      %v1579 = vpack.c.b16 %v1576, %v1575
      %v1580 = vpack.c.b16 %v1578, %v1577
      %v1584 = vsel %vm1093, %v1562, 0
      %v1587 = vsel %vm1093, %v1563, 0
      %v1590 = vsel %vm1093, %v1564, 0
      %v1593 = vsel %vm1093, %v1565, 0
      %1595 = vmatpush.bf16.msra.mxu0 0
      %1596 = vmatpush.bf16.msra.mxu0 0
      %1597 = vmatpush.bf16.msra.mxu0 0
      %1598 = vmatpush.bf16.msra.mxu0 0
      %1599 = vmatpush.bf16.msra.mxu0 0
      %1600 = vmatpush.bf16.msra.mxu0 0
      %1601 = vmatpush.bf16.msra.mxu0 %v1580
      %1602 = vmatpush.bf16.msra.mxu0 %v1579
      %1603 = vmatmul.bf16.gmra.mxu0 %v1584
      %v1604 = vpop.f32.mrf.mxu0
      %v1605 = vadd.f32 0.0, %v1604
      %v1606 = vpop.f32.mrf.mxu0
      %v1607 = vadd.f32 0.0, %v1606
      %1608 = vmatmul.bf16.gmra.mxu0 %v1587
      %v1609 = vpop.f32.mrf.mxu0
      %v1610 = vadd.f32 0.0, %v1609
      %v1611 = vpop.f32.mrf.mxu0
      %v1612 = vadd.f32 0.0, %v1611
      %1613 = vmatmul.bf16.gmra.mxu0 %v1590
      %v1614 = vpop.f32.mrf.mxu0
      %v1615 = vadd.f32 0.0, %v1614
      %v1616 = vpop.f32.mrf.mxu0
      %v1617 = vadd.f32 0.0, %v1616
      %1618 = vmatmul.bf16.gmra.mxu0 %v1593
      %v1619 = vpop.f32.mrf.mxu0
      %v1620 = vadd.f32 0.0, %v1619
      %v1621 = vpop.f32.mrf.mxu0
      %v1622 = vadd.f32 0.0, %v1621
      %1623 = vdwg.mxu0
      %v1624 = vadd.f32 %v1519, %v1605
      %v1625 = vadd.f32 %v1521, %v1607
      %v1626 = vadd.f32 %v1524, %v1610
      %v1627 = vadd.f32 %v1526, %v1612
      %v1628 = vadd.f32 %v1529, %v1615
      %v1629 = vadd.f32 %v1531, %v1617
      %v1630 = vadd.f32 %v1534, %v1620
      %v1631 = vadd.f32 %v1536, %v1622
      %v1633 = vperm.slane %v1390, 0
      %v1635 = vadd.f32 %v1624, %v1633
      %v1636 = vadd.f32 %v1625, %v1633
      %v1637 = vadd.f32 %v1626, %v1633
      %v1638 = vadd.f32 %v1627, %v1633
      %v1639 = vadd.f32 %v1628, %v1633
      %v1640 = vadd.f32 %v1629, %v1633
      %v1641 = vadd.f32 %v1630, %v1633
      %v1642 = vadd.f32 %v1631, %v1633
      %v1643 = vpack.c.bf16 %v443, %v442
      %v1644 = vpack.c.bf16 %v445, %v444
      %v1645 = vpack.c.bf16 %v447, %v446
      %v1646 = vpack.c.bf16 %v449, %v448
      %v1647 = vld [vmem:[%s11] sm:$0xf]
      %v1648 = vld [vmem:[%s11 + $0x4] sm:$0xf]
      %v1649 = vld [vmem:[%s12] sm:$0x1]
      %v1651 = vperm.slane %v1649, 0
      %v1655 = vunpack.c.l.b16 %v1647
      %v1656 = vunpack.c.l.b16 %v1648
      %v1657 = vpack.c.b16 %v1656, %v1655
      %v1660 = vsel %vm454, %v1643, 0
      %v1663 = vsel %vm454, %v1644, 0
      %v1666 = vsel %vm454, %v1645, 0
      %v1669 = vsel %vm454, %v1646, 0
      %1671 = vmatpush.bf16.msra.mxu0 0
      %1672 = vmatpush.bf16.msra.mxu0 0
      %1673 = vmatpush.bf16.msra.mxu0 0
      %1674 = vmatpush.bf16.msra.mxu0 0
      %1675 = vmatpush.bf16.msra.mxu0 0
      %1676 = vmatpush.bf16.msra.mxu0 0
      %1677 = vmatpush.bf16.msra.mxu0 0
      %1678 = vmatpush.bf16.msra.mxu0 %v1657
      %1679 = vmatmul.bf16.gmra.mxu0 %v1660
      %v1680 = vpop.f32.mrf.mxu0
      %v1681 = vadd.f32 %v1651, %v1680
      %v1682 = vpop.f32.mrf.mxu0
      %v1683 = vadd.f32 %v1651, %v1682
      %1684 = vmatmul.bf16.gmra.mxu0 %v1663
      %v1685 = vpop.f32.mrf.mxu0
      %v1686 = vadd.f32 %v1651, %v1685
      %v1687 = vpop.f32.mrf.mxu0
      %v1688 = vadd.f32 %v1651, %v1687
      %1689 = vmatmul.bf16.gmra.mxu0 %v1666
      %v1690 = vpop.f32.mrf.mxu0
      %v1691 = vadd.f32 %v1651, %v1690
      %v1692 = vpop.f32.mrf.mxu0
      %v1693 = vadd.f32 %v1651, %v1692
      %1694 = vmatmul.bf16.gmra.mxu0 %v1669
      %v1695 = vpop.f32.mrf.mxu0
      %v1696 = vadd.f32 %v1651, %v1695
      %v1697 = vpop.f32.mrf.mxu0
      %v1698 = vadd.f32 %v1651, %v1697
      %1699 = vdwg.mxu0
      %v1700 = vadd.f32 %v1681, %v1635
      %v1701 = vadd.f32 %v1683, %v1636
      %v1702 = vadd.f32 %v1686, %v1637
      %v1703 = vadd.f32 %v1688, %v1638
      %v1704 = vadd.f32 %v1691, %v1639
      %v1705 = vadd.f32 %v1693, %v1640
      %v1706 = vadd.f32 %v1696, %v1641
      %v1707 = vadd.f32 %v1698, %v1642
      %1708 = vst.msk [vmem:[%s440] sm:$0xff] %vm1093, %v1700
      %1709 = vst.msk [vmem:[%s440 + $0x8] sm:$0xff] %vm1093, %v1701
      %1710 = vst.msk [vmem:[%s440 + $0x10] sm:$0xff] %vm1093, %v1702
      %1711 = vst.msk [vmem:[%s440 + $0x18] sm:$0xff] %vm1093, %v1703
      %1712 = vst.msk [vmem:[%s440 + $0x20] sm:$0xff] %vm1093, %v1704
      %1713 = vst.msk [vmem:[%s440 + $0x28] sm:$0xff] %vm1093, %v1705
      %1714 = vst.msk [vmem:[%s440 + $0x30] sm:$0xff] %vm1093, %v1706
      %1715 = vst.msk [vmem:[%s440 + $0x38] sm:$0xff] %vm1093, %v1707
      %p1716 = scmp.lt.s32.totalorder %s24, 1
      %s1717 = scalar_select %p1716, %s24, 1
      %s1718 = smul.addr %s1717, 8
      %s1719 = smul.addr %s1718, 8
      %s1720 = scalar_lea.vmem %s13, %s1719
      // Predicated region
      $region73: #{tpu_custom_call.1} parent=71 // pred_check
        %p1721 = pneg %p320
      $region74: #{tpu_custom_call.1} parent=71 // pred_check_branch
        %1723 = sbr.rel (%p1721) target = $region76
      $region75: #{tpu_custom_call.1} parent=71 // pred_region
        _
      $region76: #{tpu_custom_call.1} parent=71 // pred_fallthru
        _
    $region72: #{tpu_custom_call.1} parent=5 // pred_fallthru
      _
    %p1724 = scmp.le.s32.totalorder 2, %s19
    // Predicated region
    $region77: #{tpu_custom_call.1} parent=5 // pred_check
      %p1725 = pneg %p1724
    $region78: #{tpu_custom_call.1} parent=5 // pred_check_branch
      %1727 = sbr.rel (%p1725) target = $region80
    $region79: #{tpu_custom_call.1} parent=5 // pred_region
      %s1728 = ssub.s32 %s19, 2
      // Predicated region
      $region81: #{tpu_custom_call.1} parent=79 // pred_check
        %p1729 = pneg %p326
      $region82: #{tpu_custom_call.1} parent=79 // pred_check_branch
        %1731 = sbr.rel (%p1729) target = $region84
      $region83: #{tpu_custom_call.1} parent=79 // pred_region
        %p1732 = scmp.lt.s32.totalorder %s25, 1
        %s1733 = scalar_select %p1732, %s25, 1
        %s1734 = smul.addr %s1733, 8
        %s1735 = smul.addr %s1734, 8
        %s1736 = scalar_lea.vmem %s13, %s1735
      $region84: #{tpu_custom_call.1} parent=79 // pred_fallthru
        _
    $region80: #{tpu_custom_call.1} parent=5 // pred_fallthru
      _
  $region6: #{tpu_custom_call.1} parent=0 // loop_footer
    %s23 = sadd.s32 1, %s19
  $region7: #{tpu_custom_call.1} parent=0 // loop_footer_branch
    %18 = sbr.rel target = $region3
  $region8: #{tpu_custom_call.1} parent=0 // loop_exit
    _

</llo_original>
